<compile_context>
chip_gen: v6e
topology: v6e:2x2x1
jax: 0.10.0
libtpu: 0.0.40
codegen_flags: <defaults>
</compile_context>

<pallas_src>
import functools
import math

import jax
import jax.numpy as jnp
import numpy as np
from jax.experimental import pallas as pl
from jax.experimental.pallas import tpu as pltpu

_LANES = 128
_BN_EPS = 1e-5


def _round_up(x, m):
    return ((x + m - 1) // m) * m


def _silu(x):
    # x * sigmoid(x): exp rides the EUP slot; approx reciprocal also goes to the
    # EUP instead of a VPU divide.
    return x * pl.reciprocal(1.0 + jnp.exp(-x), approx=True)


# ----------------------------- Pallas kernel ---------------------------------

def resnet_block_kernel(x_ref, w1_ref, b1_ref, w2l_ref, w2c_ref, w2r_ref, b2_ref,
                        w3_ref, ws_ref, b3s_ref, o_ref, *, L):
    """Fused ResNetBlock forward on one (TR, C) row tile (channels-last, lane-padded).

    x_ref   : (TR, C1p)     bf16 activations; TR % L == 0, so every tile holds
                            whole sequences -> no cross-tile halo for the k=3 conv.
    w1_ref  : (C1p, C2p)    cv1 1x1 conv weight (BN folded), bf16
    b1_ref  : (1, C2p)      cv1 bias, f32
    w2{l,c,r}_ref : (C2p, C2p)  cv2 k=3 taps (left / center / right), bf16
    b2_ref  : (1, C2p)      cv2 bias, f32
    w3_ref  : (C2p, C3p)    cv3 1x1 weight, bf16
    ws_ref  : (C1p, C3p)    shortcut 1x1 weight, bf16
    b3s_ref : (1, C3p)      cv3 bias + shortcut bias, f32
    o_ref   : (TR, C3p)     f32 output
    """
    x = x_ref[...]

    # cv1: 1x1 conv (+BN folded) + SiLU -> one MXU matmul, f32 accumulate.
    h1 = _silu(jnp.dot(x, w1_ref[...], preferred_element_type=jnp.float32)
               + b1_ref[...])

    tr = h1.shape[0]
    # Sequence-boundary mask: (TR, 1) iota broadcast along lanes.  Because the
    # tile start row is a multiple of L, local index mod L == global index mod L.
    ridx = jax.lax.broadcasted_iota(jnp.int32, (tr, 1), 0)
    pos = ridx % L
    # left[r]  = h1[r-1] (zero on the first row of each sequence)
    # right[r] = h1[r+1] (zero on the last row of each sequence)
    left = jnp.where(pos == 0, 0.0, pltpu.roll(h1, shift=1, axis=0))
    right = jnp.where(pos == (L - 1), 0.0, pltpu.roll(h1, shift=tr - 1, axis=0))

    # cv2: k=3 / pad=1 / stride=1 conv as three tap matmuls accumulated in f32.
    # (No concatenate -> no (TR, 3*C2p) VMEM materialization.)
    h2 = (jnp.dot(h1.astype(jnp.bfloat16), w2c_ref[...],
                  preferred_element_type=jnp.float32)
          + jnp.dot(left.astype(jnp.bfloat16), w2l_ref[...],
                    preferred_element_type=jnp.float32)
          + jnp.dot(right.astype(jnp.bfloat16), w2r_ref[...],
                    preferred_element_type=jnp.float32)
          + b2_ref[...])
    h2 = _silu(h2)

    # cv3 (1x1, no act) + shortcut conv (1x1, no act); the residual add is the
    # f32 accumulation of the two matmul results.
    y = (jnp.dot(h2.astype(jnp.bfloat16), w3_ref[...],
                 preferred_element_type=jnp.float32)
         + jnp.dot(x, ws_ref[...], preferred_element_type=jnp.float32)
         + b3s_ref[...])
    o_ref[...] = jnp.maximum(y, 0.0)          # ReLU


# ------------------------------- wrapper --------------------------------------

def _pad2(a, rows, cols):
    return jnp.pad(a, ((0, rows - a.shape[0]), (0, cols - a.shape[1])))


def _row_tile(n_rows, L, target):
    """Largest multiple of lcm(L, 8) <= target (whole sequences per tile keeps
    the k=3 halo inside a tile); single full tile for small inputs."""
    if n_rows <= target:
        return n_rows
    unit = (L * 8) // math.gcd(L, 8)
    return max(unit, (target // unit) * unit)


def resnet_block_forward(x_ncl, params, *, row_tile_target=1024):
    """x_ncl: (N, C1, L) float32 (PyTorch NCL). Returns (N, C3, L) float32."""
    w1, b1, w2, b2, w3, b3, ws, bs = params
    N, C1, L = x_ncl.shape
    C2 = w1.shape[1]
    C3 = w3.shape[1]

    C1p = _round_up(C1, _LANES)
    C2p = _round_up(C2, _LANES)
    C3p = _round_up(C3, _LANES)

    NL = N * L
    TR = _row_tile(NL, L, row_tile_target)
    NLp = _round_up(NL, TR)
    grid = (NLp // TR,)

    # NCL -> channels-last (N*L, C1), zero-pad rows & lanes, bf16 MXU operands.
    # TODO(synk): the NCL->NLC transpose is an extra HBM round trip; keep
    #             activations channels-last upstream to drop it entirely.
    x2d = jnp.transpose(x_ncl, (0, 2, 1)).reshape(NL, C1)
    x2d = _pad2(x2d, NLp, C1p).astype(jnp.bfloat16)

    w1p = _pad2(w1, C1p, C2p).astype(jnp.bfloat16)
    b1p = _pad2(b1, 1, C2p).astype(jnp.float32)
    w2l = _pad2(w2[0], C2p, C2p).astype(jnp.bfloat16)
    w2c = _pad2(w2[1], C2p, C2p).astype(jnp.bfloat16)
    w2r = _pad2(w2[2], C2p, C2p).astype(jnp.bfloat16)
    b2p = _pad2(b2, 1, C2p).astype(jnp.float32)
    w3p = _pad2(w3, C2p, C3p).astype(jnp.bfloat16)
    wsp = _pad2(ws, C1p, C3p).astype(jnp.bfloat16)
    b3s = (_pad2(b3, 1, C3p) + _pad2(bs, 1, C3p)).astype(jnp.float32)

    const = lambda i: (0, 0)           # weights / biases stay VMEM-resident
    in_specs = [
        pl.BlockSpec((TR, C1p), lambda i: (i, 0)),       # x (row-tiled)
        pl.BlockSpec((C1p, C2p), const),                 # w1
        pl.BlockSpec((1, C2p), const),                   # b1
        pl.BlockSpec((C2p, C2p), const),                 # w2 left tap
        pl.BlockSpec((C2p, C2p), const),                 # w2 center tap
        pl.BlockSpec((C2p, C2p), const),                 # w2 right tap
        pl.BlockSpec((1, C2p), const),                   # b2
        pl.BlockSpec((C2p, C3p), const),                 # w3
        pl.BlockSpec((C1p, C3p), const),                 # ws (shortcut)
        pl.BlockSpec((1, C3p), const),                   # b3 + bs
    ]
    out_spec = pl.BlockSpec((TR, C3p), lambda i: (i, 0))

    flops = 2 * NLp * (C1p * C2p + 3 * C2p * C2p + C2p * C3p + C1p * C3p)
    bytes_accessed = (x2d.size * 2 + NLp * C3p * 4
                      + (w1p.size + 3 * w2c.size + w3p.size + wsp.size) * 2
                      + (b1p.size + b2p.size + b3s.size) * 4)

    out2d = pl.pallas_call(
        functools.partial(resnet_block_kernel, L=L),
        out_shape=jax.ShapeDtypeStruct((NLp, C3p), jnp.float32),
        grid=grid,
        in_specs=in_specs,
        out_specs=out_spec,
        compiler_params=pltpu.CompilerParams(
            dimension_semantics=("parallel",),
            vmem_limit_bytes=32 * 1024 * 1024),
        cost_estimate=pl.CostEstimate(
            flops=flops,
            transcendentals=2 * NLp * C2p,
            bytes_accessed=bytes_accessed),
    )(x2d, w1p, b1p, w2l, w2c, w2r, b2p, w3p, wsp, b3s)

    out2d = out2d[:NL, :C3]
    return jnp.transpose(out2d.reshape(N, L, C3), (0, 2, 1))  # -> (N, C3, L)


# --------------------- deterministic parameter construction ------------------

def _bn_params(key, c):
    k1, k2, k3, k4 = jax.random.split(key, 4)
    gamma = 1.0 + 0.1 * jax.random.normal(k1, (c,), jnp.float32)
    beta = 0.1 * jax.random.normal(k2, (c,), jnp.float32)
    mean = 0.1 * jax.random.normal(k3, (c,), jnp.float32)
    var = 1.0 + 0.5 * jax.random.uniform(k4, (c,), jnp.float32)
    return gamma, beta, mean, var


def _fold_conv_bn(w_oik, bn):
    """Fold eval-mode BatchNorm1d into a conv weight.

    w_oik: (C_out, C_in, K) PyTorch layout.
    Returns (w_eff (K, C_in, C_out), b_eff (1, C_out)).
    """
    gamma, beta, mean, var = bn
    scale = gamma / jnp.sqrt(var + _BN_EPS)
    w_eff = jnp.transpose(w_oik, (2, 1, 0)) * scale[None, None, :]
    b_eff = (beta - mean * scale).reshape(1, -1)
    return w_eff, b_eff


def make_resnet_block_params(key, c1, c2, e=4):
    c3 = e * c2
    ks = jax.random.split(key, 8)
    w1_t = 0.3 * jax.random.normal(ks[0], (c2, c1, 1), jnp.float32)
    w2_t = 0.3 * jax.random.normal(ks[1], (c2, c2, 3), jnp.float32)
    w3_t = 0.3 * jax.random.normal(ks[2], (c3, c2, 1), jnp.float32)
    ws_t = 0.3 * jax.random.normal(ks[3], (c3, c1, 1), jnp.float32)
    bn1 = _bn_params(ks[4], c2)
    bn2 = _bn_params(ks[5], c2)
    bn3 = _bn_params(ks[6], c3)
    bns = _bn_params(ks[7], c3)

    w1, b1 = _fold_conv_bn(w1_t, bn1)   # (1, c1, c2)
    w2, b2 = _fold_conv_bn(w2_t, bn2)   # (3, c2, c2)
    w3, b3 = _fold_conv_bn(w3_t, bn3)   # (1, c2, c3)
    ws, bs = _fold_conv_bn(ws_t, bns)   # (1, c1, c3)

    folded = (w1[0], b1, w2, b2, w3[0], b3, ws[0], bs)
    raw = (w1_t, bn1, w2_t, bn2, w3_t, bn3, ws_t, bns)
    return folded, raw


# ----------------------- pure-JAX reference (for checking) -------------------

def _conv_bn_ref(x, w, bn, stride, pad, act):
    y = jax.lax.conv_general_dilated(
        x, w, window_strides=(stride,), padding=[(pad, pad)],
        dimension_numbers=("NCH", "OIH", "NCH"))
    gamma, beta, mean, var = bn
    scale = gamma / jnp.sqrt(var + _BN_EPS)
    y = y * scale[None, :, None] + (beta - mean * scale)[None, :, None]
    return jax.nn.silu(y) if act else y


def resnet_block_ref(x, raw):
    w1_t, bn1, w2_t, bn2, w3_t, bn3, ws_t, bns = raw
    h = _conv_bn_ref(x, w1_t, bn1, 1, 0, True)    # cv1: k=1, pad=0, SiLU
    h = _conv_bn_ref(h, w2_t, bn2, 1, 1, True)    # cv2: k=3, pad=1, SiLU
    h = _conv_bn_ref(h, w3_t, bn3, 1, 0, False)   # cv3: k=1, pad=0
    sc = _conv_bn_ref(x, ws_t, bns, 1, 0, False)  # shortcut conv (c1 != c3)
    return jax.nn.relu(h + sc)


# ------------------------------------ main ------------------------------------

if __name__ == "__main__":
    # TODO(synk): stride s != 1 of cv2/shortcut is not implemented (default
    #             ResNetBlock uses s=1, which is what is exercised here).
    N, C1, L = 4, 8, 64
    c2, e = 4, 4          # c3 = 16 != c1 -> shortcut conv path is active

    key = jax.random.PRNGKey(0)
    kx, kp = jax.random.split(key)
    x = jax.random.normal(kx, (N, C1, L), jnp.float32)

    folded, raw = make_resnet_block_params(kp, C1, c2, e)

    # row_tile_target kept small here so the demo exercises the multi-tile
    # pipelined path (grid > 1); use the default (1024) for real workloads.
    out = resnet_block_forward(x, folded, row_tile_target=128)
    out = jax.block_until_ready(out)

    ref = resnet_block_ref(x, raw)
    # bf16 MXU operands + EUP approx reciprocal in SiLU -> loose tolerance.
    np.testing.assert_allclose(np.asarray(out), np.asarray(ref),
                               rtol=6e-2, atol=3e-1)

    print("KERNEL_OK")
</pallas_src>

<mosaic_0001>
module attributes {stable_mosaic.version = 11 : i64} {
  func.func @resnet_block_kernel(%arg0: i32, %arg1: memref<128x128xbf16, #tpu.memory_space<vmem>>, %arg2: memref<128x128xbf16, #tpu.memory_space<vmem>>, %arg3: memref<1x128xf32, #tpu.memory_space<vmem>>, %arg4: memref<128x128xbf16, #tpu.memory_space<vmem>>, %arg5: memref<128x128xbf16, #tpu.memory_space<vmem>>, %arg6: memref<128x128xbf16, #tpu.memory_space<vmem>>, %arg7: memref<1x128xf32, #tpu.memory_space<vmem>>, %arg8: memref<128x128xbf16, #tpu.memory_space<vmem>>, %arg9: memref<128x128xbf16, #tpu.memory_space<vmem>>, %arg10: memref<1x128xf32, #tpu.memory_space<vmem>>, %arg11: memref<128x128xf32, #tpu.memory_space<vmem>>) attributes {dimension_semantics = [#tpu.dimension_semantics<parallel>], iteration_bounds = array<i64: 2>, scalar_prefetch = 0 : i64, scratch_operands = 0 : i64, tpu.core_type = #tpu.core_type<tc>, window_params = [{transform_indices = @transform_0, window_bounds = array<i64: 128, 128>}, {pipeline_mode = #tpu.pipeline_mode<synchronous>, transform_indices = @transform_1, window_bounds = array<i64: 128, 128>}, {pipeline_mode = #tpu.pipeline_mode<synchronous>, transform_indices = @transform_2, window_bounds = array<i64: 1, 128>}, {pipeline_mode = #tpu.pipeline_mode<synchronous>, transform_indices = @transform_3, window_bounds = array<i64: 128, 128>}, {pipeline_mode = #tpu.pipeline_mode<synchronous>, transform_indices = @transform_4, window_bounds = array<i64: 128, 128>}, {pipeline_mode = #tpu.pipeline_mode<synchronous>, transform_indices = @transform_5, window_bounds = array<i64: 128, 128>}, {pipeline_mode = #tpu.pipeline_mode<synchronous>, transform_indices = @transform_6, window_bounds = array<i64: 1, 128>}, {pipeline_mode = #tpu.pipeline_mode<synchronous>, transform_indices = @transform_7, window_bounds = array<i64: 128, 128>}, {pipeline_mode = #tpu.pipeline_mode<synchronous>, transform_indices = @transform_8, window_bounds = array<i64: 128, 128>}, {pipeline_mode = #tpu.pipeline_mode<synchronous>, transform_indices = @transform_9, window_bounds = array<i64: 1, 128>}, {transform_indices = @transform_10, window_bounds = array<i64: 128, 128>}]} {
    %c0 = arith.constant 0 : index
    %c0_0 = arith.constant 0 : index
    %0 = vector.load %arg1[%c0, %c0_0] : memref<128x128xbf16, #tpu.memory_space<vmem>>, vector<128x128xbf16>
    %c0_1 = arith.constant 0 : index
    %c0_2 = arith.constant 0 : index
    %1 = vector.load %arg2[%c0_1, %c0_2] : memref<128x128xbf16, #tpu.memory_space<vmem>>, vector<128x128xbf16>
    %cst = arith.constant dense<0.000000e+00> : vector<128x128xf32>
    %2 = tpu.matmul %0, %1, %cst {dimension_numbers = #tpu.dot_dimension_numbers<[1], [0], [0], [1], [0, 0, 1, 1], [], []>} : vector<128x128xbf16>, vector<128x128xbf16>, vector<128x128xf32> -> vector<128x128xf32>
    %c0_3 = arith.constant 0 : index
    %c0_4 = arith.constant 0 : index
    %3 = vector.load %arg3[%c0_3, %c0_4] : memref<1x128xf32, #tpu.memory_space<vmem>>, vector<1x128xf32>
    %4 = vector.broadcast %3 : vector<1x128xf32> to vector<128x128xf32>
    %5 = arith.addf %2, %4 : vector<128x128xf32>
    %cst_5 = arith.constant 0.000000e+00 : f32
    %6 = vector.broadcast %cst_5 : f32 to vector<128x128xf32>
    %7 = arith.subf %6, %5 : vector<128x128xf32>
    %8 = math.exp %7 : vector<128x128xf32>
    %cst_6 = arith.constant 1.000000e+00 : f32
    %9 = vector.broadcast %cst_6 : f32 to vector<128x128xf32>
    %10 = arith.addf %9, %8 : vector<128x128xf32>
    %11 = tpu.reciprocal %10 {approx = true} : vector<128x128xf32> -> vector<128x128xf32>
    %12 = arith.mulf %5, %11 : vector<128x128xf32>
    %13 = tpu.iota {dimensions = array<i32: 0>} : vector<128x1xi32>
    %c64_i32 = arith.constant 64 : i32
    %c0_i32 = arith.constant 0 : i32
    %14 = arith.cmpi eq, %c64_i32, %c0_i32 : i32
    %c1_i32 = arith.constant 1 : i32
    %15 = arith.select %14, %c1_i32, %c64_i32 : i32
    %16 = vector.broadcast %15 : i32 to vector<128x1xi32>
    %17 = arith.remsi %13, %16 : vector<128x1xi32>
    %c0_i32_7 = arith.constant 0 : i32
    %18 = vector.broadcast %c0_i32_7 : i32 to vector<128x1xi32>
    %19 = arith.cmpi ne, %17, %18 : vector<128x1xi32>
    %c0_i32_8 = arith.constant 0 : i32
    %20 = vector.broadcast %c0_i32_8 : i32 to vector<128x1xi32>
    %21 = arith.cmpi slt, %17, %20 : vector<128x1xi32>
    %c0_i32_9 = arith.constant 0 : i32
    %22 = arith.cmpi slt, %15, %c0_i32_9 : i32
    %23 = vector.broadcast %22 : i1 to vector<128x1xi1>
    %24 = vector.broadcast %23 : vector<128x1xi1> to vector<128x1xi1>
    %25 = arith.xori %21, %24 : vector<128x1xi1>
    %26 = arith.andi %25, %19 : vector<128x1xi1>
    %27 = vector.broadcast %15 : i32 to vector<128x1xi32>
    %28 = arith.addi %17, %27 : vector<128x1xi32>
    %29 = arith.select %26, %28, %17 : vector<128x1xi1>, vector<128x1xi32>
    %c0_i32_10 = arith.constant 0 : i32
    %30 = vector.broadcast %c0_i32_10 : i32 to vector<128x1xi32>
    %31 = arith.cmpi eq, %29, %30 : vector<128x1xi32>
    %c1_i32_11 = arith.constant 1 : i32
    %32 = tpu.dynamic_rotate %12 by %c1_i32_11 dim 0 : vector<128x128xf32>, i32 -> vector<128x128xf32>
    %cst_12 = arith.constant 0.000000e+00 : f32
    %33 = vector.shape_cast %31 : vector<128x1xi1> to vector<128x1xi1>
    %34 = vector.broadcast %33 : vector<128x1xi1> to vector<128x128xi1>
    %35 = vector.broadcast %cst_12 : f32 to vector<128x128xf32>
    %36 = arith.select %34, %35, %32 : vector<128x128xi1>, vector<128x128xf32>
    %c63_i32 = arith.constant 63 : i32
    %37 = vector.broadcast %c63_i32 : i32 to vector<128x1xi32>
    %38 = arith.cmpi eq, %29, %37 : vector<128x1xi32>
    %c127_i32 = arith.constant 127 : i32
    %39 = tpu.dynamic_rotate %12 by %c127_i32 dim 0 : vector<128x128xf32>, i32 -> vector<128x128xf32>
    %cst_13 = arith.constant 0.000000e+00 : f32
    %40 = vector.shape_cast %38 : vector<128x1xi1> to vector<128x1xi1>
    %41 = vector.broadcast %40 : vector<128x1xi1> to vector<128x128xi1>
    %42 = vector.broadcast %cst_13 : f32 to vector<128x128xf32>
    %43 = arith.select %41, %42, %39 : vector<128x128xi1>, vector<128x128xf32>
    %44 = arith.truncf %12 : vector<128x128xf32> to vector<128x128xbf16>
    %c0_14 = arith.constant 0 : index
    %c0_15 = arith.constant 0 : index
    %45 = vector.load %arg5[%c0_14, %c0_15] : memref<128x128xbf16, #tpu.memory_space<vmem>>, vector<128x128xbf16>
    %cst_16 = arith.constant dense<0.000000e+00> : vector<128x128xf32>
    %46 = tpu.matmul %44, %45, %cst_16 {dimension_numbers = #tpu.dot_dimension_numbers<[1], [0], [0], [1], [0, 0, 1, 1], [], []>} : vector<128x128xbf16>, vector<128x128xbf16>, vector<128x128xf32> -> vector<128x128xf32>
    %47 = arith.truncf %36 : vector<128x128xf32> to vector<128x128xbf16>
    %c0_17 = arith.constant 0 : index
    %c0_18 = arith.constant 0 : index
    %48 = vector.load %arg4[%c0_17, %c0_18] : memref<128x128xbf16, #tpu.memory_space<vmem>>, vector<128x128xbf16>
    %cst_19 = arith.constant dense<0.000000e+00> : vector<128x128xf32>
    %49 = tpu.matmul %47, %48, %cst_19 {dimension_numbers = #tpu.dot_dimension_numbers<[1], [0], [0], [1], [0, 0, 1, 1], [], []>} : vector<128x128xbf16>, vector<128x128xbf16>, vector<128x128xf32> -> vector<128x128xf32>
    %50 = arith.addf %46, %49 : vector<128x128xf32>
    %51 = arith.truncf %43 : vector<128x128xf32> to vector<128x128xbf16>
    %c0_20 = arith.constant 0 : index
    %c0_21 = arith.constant 0 : index
    %52 = vector.load %arg6[%c0_20, %c0_21] : memref<128x128xbf16, #tpu.memory_space<vmem>>, vector<128x128xbf16>
    %cst_22 = arith.constant dense<0.000000e+00> : vector<128x128xf32>
    %53 = tpu.matmul %51, %52, %cst_22 {dimension_numbers = #tpu.dot_dimension_numbers<[1], [0], [0], [1], [0, 0, 1, 1], [], []>} : vector<128x128xbf16>, vector<128x128xbf16>, vector<128x128xf32> -> vector<128x128xf32>
    %54 = arith.addf %50, %53 : vector<128x128xf32>
    %c0_23 = arith.constant 0 : index
    %c0_24 = arith.constant 0 : index
    %55 = vector.load %arg7[%c0_23, %c0_24] : memref<1x128xf32, #tpu.memory_space<vmem>>, vector<1x128xf32>
    %56 = vector.broadcast %55 : vector<1x128xf32> to vector<128x128xf32>
    %57 = arith.addf %54, %56 : vector<128x128xf32>
    %cst_25 = arith.constant 0.000000e+00 : f32
    %58 = vector.broadcast %cst_25 : f32 to vector<128x128xf32>
    %59 = arith.subf %58, %57 : vector<128x128xf32>
    %60 = math.exp %59 : vector<128x128xf32>
    %cst_26 = arith.constant 1.000000e+00 : f32
    %61 = vector.broadcast %cst_26 : f32 to vector<128x128xf32>
    %62 = arith.addf %61, %60 : vector<128x128xf32>
    %63 = tpu.reciprocal %62 {approx = true} : vector<128x128xf32> -> vector<128x128xf32>
    %64 = arith.mulf %57, %63 : vector<128x128xf32>
    %65 = arith.truncf %64 : vector<128x128xf32> to vector<128x128xbf16>
    %c0_27 = arith.constant 0 : index
    %c0_28 = arith.constant 0 : index
    %66 = vector.load %arg8[%c0_27, %c0_28] : memref<128x128xbf16, #tpu.memory_space<vmem>>, vector<128x128xbf16>
    %cst_29 = arith.constant dense<0.000000e+00> : vector<128x128xf32>
    %67 = tpu.matmul %65, %66, %cst_29 {dimension_numbers = #tpu.dot_dimension_numbers<[1], [0], [0], [1], [0, 0, 1, 1], [], []>} : vector<128x128xbf16>, vector<128x128xbf16>, vector<128x128xf32> -> vector<128x128xf32>
    %c0_30 = arith.constant 0 : index
    %c0_31 = arith.constant 0 : index
    %68 = vector.load %arg9[%c0_30, %c0_31] : memref<128x128xbf16, #tpu.memory_space<vmem>>, vector<128x128xbf16>
    %cst_32 = arith.constant dense<0.000000e+00> : vector<128x128xf32>
    %69 = tpu.matmul %0, %68, %cst_32 {dimension_numbers = #tpu.dot_dimension_numbers<[1], [0], [0], [1], [0, 0, 1, 1], [], []>} : vector<128x128xbf16>, vector<128x128xbf16>, vector<128x128xf32> -> vector<128x128xf32>
    %70 = arith.addf %67, %69 : vector<128x128xf32>
    %c0_33 = arith.constant 0 : index
    %c0_34 = arith.constant 0 : index
    %71 = vector.load %arg10[%c0_33, %c0_34] : memref<1x128xf32, #tpu.memory_space<vmem>>, vector<1x128xf32>
    %72 = vector.broadcast %71 : vector<1x128xf32> to vector<128x128xf32>
    %73 = arith.addf %70, %72 : vector<128x128xf32>
    %cst_35 = arith.constant 0.000000e+00 : f32
    %74 = vector.broadcast %cst_35 : f32 to vector<128x128xf32>
    %75 = arith.maximumf %73, %74 : vector<128x128xf32>
    %c0_36 = arith.constant 0 : index
    %c0_37 = arith.constant 0 : index
    %76 = vector.load %arg11[%c0_36, %c0_37] : memref<128x128xf32, #tpu.memory_space<vmem>>, vector<128x128xf32>
    tpu.vector_store %arg11[%c0_36, %c0_37], %75 {strides = array<i32>} : memref<128x128xf32, #tpu.memory_space<vmem>>, vector<128x128xf32>,
    return
  }
  func.func @transform_0(%arg0: i32) -> (i32, i32) {
    %c0_i32 = arith.constant 0 : i32
    %c0_i32_0 = arith.constant 0 : i32
    return %arg0, %c0_i32 : i32, i32
  }
  func.func @transform_1(%arg0: i32) -> (i32, i32) {
    %c0_i32 = arith.constant 0 : i32
    %c0_i32_0 = arith.constant 0 : i32
    %c0_i32_1 = arith.constant 0 : i32
    return %c0_i32, %c0_i32_0 : i32, i32
  }
  func.func @transform_2(%arg0: i32) -> (i32, i32) {
    %c0_i32 = arith.constant 0 : i32
    %c0_i32_0 = arith.constant 0 : i32
    %c0_i32_1 = arith.constant 0 : i32
    return %c0_i32, %c0_i32_0 : i32, i32
  }
  func.func @transform_3(%arg0: i32) -> (i32, i32) {
    %c0_i32 = arith.constant 0 : i32
    %c0_i32_0 = arith.constant 0 : i32
    %c0_i32_1 = arith.constant 0 : i32
    return %c0_i32, %c0_i32_0 : i32, i32
  }
  func.func @transform_4(%arg0: i32) -> (i32, i32) {
    %c0_i32 = arith.constant 0 : i32
    %c0_i32_0 = arith.constant 0 : i32
    %c0_i32_1 = arith.constant 0 : i32
    return %c0_i32, %c0_i32_0 : i32, i32
  }
  func.func @transform_5(%arg0: i32) -> (i32, i32) {
    %c0_i32 = arith.constant 0 : i32
    %c0_i32_0 = arith.constant 0 : i32
    %c0_i32_1 = arith.constant 0 : i32
    return %c0_i32, %c0_i32_0 : i32, i32
  }
  func.func @transform_6(%arg0: i32) -> (i32, i32) {
    %c0_i32 = arith.constant 0 : i32
    %c0_i32_0 = arith.constant 0 : i32
    %c0_i32_1 = arith.constant 0 : i32
    return %c0_i32, %c0_i32_0 : i32, i32
  }
  func.func @transform_7(%arg0: i32) -> (i32, i32) {
    %c0_i32 = arith.constant 0 : i32
    %c0_i32_0 = arith.constant 0 : i32
    %c0_i32_1 = arith.constant 0 : i32
    return %c0_i32, %c0_i32_0 : i32, i32
  }
  func.func @transform_8(%arg0: i32) -> (i32, i32) {
    %c0_i32 = arith.constant 0 : i32
    %c0_i32_0 = arith.constant 0 : i32
    %c0_i32_1 = arith.constant 0 : i32
    return %c0_i32, %c0_i32_0 : i32, i32
  }
  func.func @transform_9(%arg0: i32) -> (i32, i32) {
    %c0_i32 = arith.constant 0 : i32
    %c0_i32_0 = arith.constant 0 : i32
    %c0_i32_1 = arith.constant 0 : i32
    return %c0_i32, %c0_i32_0 : i32, i32
  }
  func.func @transform_10(%arg0: i32) -> (i32, i32) {
    %c0_i32 = arith.constant 0 : i32
    %c0_i32_0 = arith.constant 0 : i32
    return %arg0, %c0_i32 : i32, i32
  }
}

</mosaic_0001>

<llo_original>
// kernel: tpu_custom_call.1
$region0: #{tpu_custom_call.1}
  #allocation0 [shape = 'u32[]', space=smem, size = 0x4, offset = 0x4, fixed_abs, tag = 'smem constant byte address 0x4 - core index']
  #allocation1 [shape = 'u32[144,128]{1,0:T(1,128)}', space=vmem, size = 0x12000, scoped, tag = 'internal scratch']
  %s0 = inlined_call_operand.hbm [shape: bf16[256,128], index: 0, kind: input, shape index: {}]
  %s1 = inlined_call_operand.hbm [shape: bf16[128,128], index: 1, kind: input, shape index: {}]
  %s2 = inlined_call_operand.vmem [shape: f32[1,128], index: 2, kind: input, shape index: {}]
  %s3 = inlined_call_operand.hbm [shape: bf16[128,128], index: 3, kind: input, shape index: {}]
  %s4 = inlined_call_operand.hbm [shape: bf16[128,128], index: 4, kind: input, shape index: {}]
  %s5 = inlined_call_operand.hbm [shape: bf16[128,128], index: 5, kind: input, shape index: {}]
  %s6 = inlined_call_operand.vmem [shape: f32[1,128], index: 6, kind: input, shape index: {}]
  %s7 = inlined_call_operand.hbm [shape: bf16[128,128], index: 7, kind: input, shape index: {}]
  %s8 = inlined_call_operand.hbm [shape: bf16[128,128], index: 8, kind: input, shape index: {}]
  %s9 = inlined_call_operand.vmem [shape: f32[1,128], index: 9, kind: input, shape index: {}]
  %s10 = inlined_call_operand.hbm [shape: f32[256,128], index: 10, kind: output, shape index: {}]
  %s11 = sld [smem:[#allocation0]]
  $region101: #{tpu_custom_call.1} parent=0
    _
  %s13 = ssub.s32 1, %s11
  %s14 = scalar_select 0, %s13, %s11
  $region1: #{tpu_custom_call.1} parent=0
    #allocation2 [shape = 'u8[65536]{0}', space=vmem, size = 0x10000, scoped, tag = 'input window, operand 0']
    #allocation3 [shape = 's32[2]{0}', space=sflag, size = 0x8, scoped, tag = 'scoped memory for tpu_custom_call.1']
    #allocation4 [shape = 's32[2]{0}', space=sflag, size = 0x8, scoped, tag = 'scoped memory for tpu_custom_call.1']
    #allocation5 [shape = 'u8[32768]{0}', space=vmem, size = 0x8000, scoped, tag = 'input window, operand 1, single buffered']
    #allocation6 [shape = 's32[1]{0}', space=sflag, size = 0x4, scoped, tag = 'scoped memory for tpu_custom_call.1']
    #allocation7 [shape = 'u8[32768]{0}', space=vmem, size = 0x8000, scoped, tag = 'input window, operand 3, single buffered']
    #allocation8 [shape = 'u8[32768]{0}', space=vmem, size = 0x8000, scoped, tag = 'input window, operand 4, single buffered']
    #allocation9 [shape = 's32[1]{0}', space=sflag, size = 0x4, scoped, tag = 'scoped memory for tpu_custom_call.1']
    #allocation10 [shape = 'u8[32768]{0}', space=vmem, size = 0x8000, scoped, tag = 'input window, operand 5, single buffered']
    #allocation11 [shape = 'u8[32768]{0}', space=vmem, size = 0x8000, scoped, tag = 'input window, operand 7, single buffered']
    #allocation12 [shape = 's32[1]{0}', space=sflag, size = 0x4, scoped, tag = 'scoped memory for tpu_custom_call.1']
    #allocation13 [shape = 'u8[32768]{0}', space=vmem, size = 0x8000, scoped, tag = 'input window, operand 8, single buffered']
    #allocation14 [shape = 'u8[131072]{0}', space=vmem, size = 0x20000, scoped, tag = 'output window, operand 0']
    %15 = vsyncpa [#allocation3], 0
    %s16 = scalar_lea.sflag [#allocation3], 1
    %17 = vsyncpa %s16, 0
    %18 = vsyncpa [#allocation6], 0
    %19 = vsyncpa [#allocation9], 0
    %20 = vsyncpa [#allocation12], 0
    %21 = vsyncpa [#allocation4], 0
    %s22 = scalar_lea.sflag [#allocation4], 1
    %23 = vsyncpa %s22, 0
    loop: start=0, step=1, limit=4
    $region2: #{tpu_custom_call.1} parent=1 // loop_pre_header
      _
    $region3: #{tpu_custom_call.1} parent=1 // loop_header
      %s25 = sphi 0, %s29
      %p26 = scmp.ge.s32.totalorder %s25, 4
      %s35 = sphi 0, %s37
      %s38 = sphi 0, %s35
      %s39 = sphi 0, %s38
      %s55 = sphi 0, %s39
      %s59 = sphi 0, %s59
      %s61 = sphi 0, %s59
      %s62 = sphi 0, %s61
      %s76 = sphi 0, %s62
      %s80 = sphi 0, %s80
      %s82 = sphi 0, %s80
      %s83 = sphi 0, %s82
      %s97 = sphi 0, %s83
      %s101 = sphi 0, %s101
      %s103 = sphi 0, %s101
      %s104 = sphi 0, %s103
      %s118 = sphi 0, %s104
      %s122 = sphi 0, %s122
      %s124 = sphi 0, %s122
      %s125 = sphi 0, %s124
      %s139 = sphi 0, %s125
      %s143 = sphi 0, %s143
      %s145 = sphi 0, %s143
      %s146 = sphi 0, %s145
      %s160 = sphi 0, %s146
      %s164 = sphi 0, %s164
      %s166 = sphi 0, %s164
      %s167 = sphi 0, %s166
      %s181 = sphi 0, %s167
      %s185 = sphi 0, %s185
      %s187 = sphi 0, %s185
      %s188 = sphi 0, %s187
      %s202 = sphi 0, %s188
      %s206 = sphi 0, %s206
      %s208 = sphi 0, %s206
      %s209 = sphi 0, %s208
      %s223 = sphi 0, %s209
      %s227 = sphi 0, %s227
      %s229 = sphi 0, %s227
      %s230 = sphi 0, %s229
      %s244 = sphi 0, %s230
      %s250 = sphi 0, %s252
      %s253 = sphi 0, %s250
      %s254 = sphi 0, %s253
      %s270 = sphi 0, %s254
    $region4: #{tpu_custom_call.1} parent=1 // loop_header_branch
      %28 = sbr.rel (%p26) target = $region8
    $region5: #{tpu_custom_call.1} parent=1 // loop_body
      %s30 = ssub.s32 %s25, 1
      %s31 = ssub.s32 %s25, 2
      %s32 = sadd.s32 %s25, 1
      %s33 = ssub.s32 %s25, %s32
      %p34 = scmp.eq.s32.totalorder %s33, 0
      %s36 = sadd.s32 %s35, 1
      %s37 = scalar_select %p34, %s35, %s36
      %p40 = pneg %p34
      %p41 = scmp.eq.s32.totalorder %s25, 1
      %p42 = por %p40, %p41
      %p43 = scmp.ne.s32.totalorder %s35, %s38
      %p44 = scmp.eq.s32.totalorder %s25, 0
      %p45 = por %p43, %p44
      %p46 = scmp.ne.s32.totalorder %s35, %s38
      %p47 = scmp.eq.s32.totalorder %s30, 1
      %p48 = por %p46, %p47
      %p49 = scmp.ne.s32.totalorder %s38, %s39
      %p50 = scmp.eq.s32.totalorder %s30, 0
      %p51 = por %p49, %p50
      %p52 = scmp.ne.s32.totalorder %s38, %s39
      %p53 = scmp.eq.s32.totalorder %s31, 1
      %p54 = por %p52, %p53
      %p56 = scmp.ne.s32.totalorder %s39, %s55
      %p57 = scmp.eq.s32.totalorder %s31, 0
      %p58 = por %p56, %p57
      %s60 = sadd.s32 %s59, 1
      %p63 = scmp.eq.s32.totalorder %s25, 1
      %p64 = scmp.ne.s32.totalorder %s59, %s61
      %p65 = scmp.eq.s32.totalorder %s25, 0
      %p66 = por %p64, %p65
      %p67 = scmp.ne.s32.totalorder %s59, %s61
      %p68 = scmp.eq.s32.totalorder %s30, 1
      %p69 = por %p67, %p68
      %p70 = scmp.ne.s32.totalorder %s61, %s62
      %p71 = scmp.eq.s32.totalorder %s30, 0
      %p72 = por %p70, %p71
      %p73 = scmp.ne.s32.totalorder %s61, %s62
      %p74 = scmp.eq.s32.totalorder %s31, 1
      %p75 = por %p73, %p74
      %p77 = scmp.ne.s32.totalorder %s62, %s76
      %p78 = scmp.eq.s32.totalorder %s31, 0
      %p79 = por %p77, %p78
      %s81 = sadd.s32 %s80, 1
      %p84 = scmp.eq.s32.totalorder %s25, 1
      %p85 = scmp.ne.s32.totalorder %s80, %s82
      %p86 = scmp.eq.s32.totalorder %s25, 0
      %p87 = por %p85, %p86
      %p88 = scmp.ne.s32.totalorder %s80, %s82
      %p89 = scmp.eq.s32.totalorder %s30, 1
      %p90 = por %p88, %p89
      %p91 = scmp.ne.s32.totalorder %s82, %s83
      %p92 = scmp.eq.s32.totalorder %s30, 0
      %p93 = por %p91, %p92
      %p94 = scmp.ne.s32.totalorder %s82, %s83
      %p95 = scmp.eq.s32.totalorder %s31, 1
      %p96 = por %p94, %p95
      %p98 = scmp.ne.s32.totalorder %s83, %s97
      %p99 = scmp.eq.s32.totalorder %s31, 0
      %p100 = por %p98, %p99
      %s102 = sadd.s32 %s101, 1
      %p105 = scmp.eq.s32.totalorder %s25, 1
      %p106 = scmp.ne.s32.totalorder %s101, %s103
      %p107 = scmp.eq.s32.totalorder %s25, 0
      %p108 = por %p106, %p107
      %p109 = scmp.ne.s32.totalorder %s101, %s103
      %p110 = scmp.eq.s32.totalorder %s30, 1
      %p111 = por %p109, %p110
      %p112 = scmp.ne.s32.totalorder %s103, %s104
      %p113 = scmp.eq.s32.totalorder %s30, 0
      %p114 = por %p112, %p113
      %p115 = scmp.ne.s32.totalorder %s103, %s104
      %p116 = scmp.eq.s32.totalorder %s31, 1
      %p117 = por %p115, %p116
      %p119 = scmp.ne.s32.totalorder %s104, %s118
      %p120 = scmp.eq.s32.totalorder %s31, 0
      %p121 = por %p119, %p120
      %s123 = sadd.s32 %s122, 1
      %p126 = scmp.eq.s32.totalorder %s25, 1
      %p127 = scmp.ne.s32.totalorder %s122, %s124
      %p128 = scmp.eq.s32.totalorder %s25, 0
      %p129 = por %p127, %p128
      %p130 = scmp.ne.s32.totalorder %s122, %s124
      %p131 = scmp.eq.s32.totalorder %s30, 1
      %p132 = por %p130, %p131
      %p133 = scmp.ne.s32.totalorder %s124, %s125
      %p134 = scmp.eq.s32.totalorder %s30, 0
      %p135 = por %p133, %p134
      %p136 = scmp.ne.s32.totalorder %s124, %s125
      %p137 = scmp.eq.s32.totalorder %s31, 1
      %p138 = por %p136, %p137
      %p140 = scmp.ne.s32.totalorder %s125, %s139
      %p141 = scmp.eq.s32.totalorder %s31, 0
      %p142 = por %p140, %p141
      %s144 = sadd.s32 %s143, 1
      %p147 = scmp.eq.s32.totalorder %s25, 1
      %p148 = scmp.ne.s32.totalorder %s143, %s145
      %p149 = scmp.eq.s32.totalorder %s25, 0
      %p150 = por %p148, %p149
      %p151 = scmp.ne.s32.totalorder %s143, %s145
      %p152 = scmp.eq.s32.totalorder %s30, 1
      %p153 = por %p151, %p152
      %p154 = scmp.ne.s32.totalorder %s145, %s146
      %p155 = scmp.eq.s32.totalorder %s30, 0
      %p156 = por %p154, %p155
      %p157 = scmp.ne.s32.totalorder %s145, %s146
      %p158 = scmp.eq.s32.totalorder %s31, 1
      %p159 = por %p157, %p158
      %p161 = scmp.ne.s32.totalorder %s146, %s160
      %p162 = scmp.eq.s32.totalorder %s31, 0
      %p163 = por %p161, %p162
      %s165 = sadd.s32 %s164, 1
      %p168 = scmp.eq.s32.totalorder %s25, 1
      %p169 = scmp.ne.s32.totalorder %s164, %s166
      %p170 = scmp.eq.s32.totalorder %s25, 0
      %p171 = por %p169, %p170
      %p172 = scmp.ne.s32.totalorder %s164, %s166
      %p173 = scmp.eq.s32.totalorder %s30, 1
      %p174 = por %p172, %p173
      %p175 = scmp.ne.s32.totalorder %s166, %s167
      %p176 = scmp.eq.s32.totalorder %s30, 0
      %p177 = por %p175, %p176
      %p178 = scmp.ne.s32.totalorder %s166, %s167
      %p179 = scmp.eq.s32.totalorder %s31, 1
      %p180 = por %p178, %p179
      %p182 = scmp.ne.s32.totalorder %s167, %s181
      %p183 = scmp.eq.s32.totalorder %s31, 0
      %p184 = por %p182, %p183
      %s186 = sadd.s32 %s185, 1
      %p189 = scmp.eq.s32.totalorder %s25, 1
      %p190 = scmp.ne.s32.totalorder %s185, %s187
      %p191 = scmp.eq.s32.totalorder %s25, 0
      %p192 = por %p190, %p191
      %p193 = scmp.ne.s32.totalorder %s185, %s187
      %p194 = scmp.eq.s32.totalorder %s30, 1
      %p195 = por %p193, %p194
      %p196 = scmp.ne.s32.totalorder %s187, %s188
      %p197 = scmp.eq.s32.totalorder %s30, 0
      %p198 = por %p196, %p197
      %p199 = scmp.ne.s32.totalorder %s187, %s188
      %p200 = scmp.eq.s32.totalorder %s31, 1
      %p201 = por %p199, %p200
      %p203 = scmp.ne.s32.totalorder %s188, %s202
      %p204 = scmp.eq.s32.totalorder %s31, 0
      %p205 = por %p203, %p204
      %s207 = sadd.s32 %s206, 1
      %p210 = scmp.eq.s32.totalorder %s25, 1
      %p211 = scmp.ne.s32.totalorder %s206, %s208
      %p212 = scmp.eq.s32.totalorder %s25, 0
      %p213 = por %p211, %p212
      %p214 = scmp.ne.s32.totalorder %s206, %s208
      %p215 = scmp.eq.s32.totalorder %s30, 1
      %p216 = por %p214, %p215
      %p217 = scmp.ne.s32.totalorder %s208, %s209
      %p218 = scmp.eq.s32.totalorder %s30, 0
      %p219 = por %p217, %p218
      %p220 = scmp.ne.s32.totalorder %s208, %s209
      %p221 = scmp.eq.s32.totalorder %s31, 1
      %p222 = por %p220, %p221
      %p224 = scmp.ne.s32.totalorder %s209, %s223
      %p225 = scmp.eq.s32.totalorder %s31, 0
      %p226 = por %p224, %p225
      %s228 = sadd.s32 %s227, 1
      %p231 = scmp.eq.s32.totalorder %s25, 1
      %p232 = scmp.ne.s32.totalorder %s227, %s229
      %p233 = scmp.eq.s32.totalorder %s25, 0
      %p234 = por %p232, %p233
      %p235 = scmp.ne.s32.totalorder %s227, %s229
      %p236 = scmp.eq.s32.totalorder %s30, 1
      %p237 = por %p235, %p236
      %p238 = scmp.ne.s32.totalorder %s229, %s230
      %p239 = scmp.eq.s32.totalorder %s30, 0
      %p240 = por %p238, %p239
      %p241 = scmp.ne.s32.totalorder %s229, %s230
      %p242 = scmp.eq.s32.totalorder %s31, 1
      %p243 = por %p241, %p242
      %p245 = scmp.ne.s32.totalorder %s230, %s244
      %p246 = scmp.eq.s32.totalorder %s31, 0
      %p247 = por %p245, %p246
      %s248 = ssub.s32 %s25, %s32
      %p249 = scmp.eq.s32.totalorder %s248, 0
      %s251 = sadd.s32 %s250, 1
      %s252 = scalar_select %p249, %s250, %s251
      %p255 = pneg %p249
      %p256 = scmp.eq.s32.totalorder %s25, 1
      %p257 = por %p255, %p256
      %p258 = scmp.ne.s32.totalorder %s250, %s253
      %p259 = scmp.eq.s32.totalorder %s25, 0
      %p260 = por %p258, %p259
      %p261 = scmp.ne.s32.totalorder %s250, %s253
      %p262 = scmp.eq.s32.totalorder %s30, 1
      %p263 = por %p261, %p262
      %p264 = scmp.ne.s32.totalorder %s253, %s254
      %p265 = scmp.eq.s32.totalorder %s30, 0
      %p266 = por %p264, %p265
      %p267 = scmp.ne.s32.totalorder %s253, %s254
      %p268 = scmp.eq.s32.totalorder %s31, 1
      %p269 = por %p267, %p268
      %p271 = scmp.ne.s32.totalorder %s254, %s270
      %p272 = scmp.eq.s32.totalorder %s31, 0
      %p273 = por %p271, %p272
      %p274 = scmp.le.s32.totalorder 1, %s25
      %p275 = scmp.lt.s32.totalorder %s25, 3
      %p276 = pnand %p274, %p275
      %p277 = pneg %p276
      // Predicated region
      $region9: #{tpu_custom_call.1} parent=5 // pred_check
        _
      $region10: #{tpu_custom_call.1} parent=5 // pred_check_branch
        %279 = sbr.rel (%p276) target = $region12
      $region11: #{tpu_custom_call.1} parent=5 // pred_region
        %s280 = ssub.s32 %s25, 1
        // Predicated region
        $region13: #{tpu_custom_call.1} parent=11 // pred_check
          %p281 = pneg %p72
        $region14: #{tpu_custom_call.1} parent=11 // pred_check_branch
          %283 = sbr.rel (%p281) target = $region16
        $region15: #{tpu_custom_call.1} parent=11 // pred_region
          %s285 = ssub.s32 1024, 1024
          %286 = vsyncadd [#allocation6], %s285
          %s287 = sshll.u32 [#allocation5], 4
          %s288 = int_to_ptr.vmem [resolvable:$true] %s287
          %293 = dma.hbm_to_vmem [thread:$0]  %s1, 1024, %s288, [#allocation6], 64, 64, 4
        $region16: #{tpu_custom_call.1} parent=11 // pred_fallthru
          _
        // Predicated region
        $region17: #{tpu_custom_call.1} parent=11 // pred_check
          %p294 = pneg %p93
        $region18: #{tpu_custom_call.1} parent=11 // pred_check_branch
          %296 = sbr.rel (%p294) target = $region20
        $region19: #{tpu_custom_call.1} parent=11 // pred_region
          _
        $region20: #{tpu_custom_call.1} parent=11 // pred_fallthru
          _
        // Predicated region
        $region21: #{tpu_custom_call.1} parent=11 // pred_check
          %p297 = pneg %p114
        $region22: #{tpu_custom_call.1} parent=11 // pred_check_branch
          %299 = sbr.rel (%p297) target = $region24
        $region23: #{tpu_custom_call.1} parent=11 // pred_region
          %s301 = ssub.s32 1024, 1024
          %302 = vsyncadd [#allocation6], %s301
          %s303 = sshll.u32 [#allocation7], 4
          %s304 = int_to_ptr.vmem [resolvable:$true] %s303
          %309 = dma.hbm_to_vmem [thread:$0]  %s3, 1024, %s304, [#allocation6], 64, 64, 4
        $region24: #{tpu_custom_call.1} parent=11 // pred_fallthru
          _
        // Predicated region
        $region25: #{tpu_custom_call.1} parent=11 // pred_check
          %p310 = pneg %p135
        $region26: #{tpu_custom_call.1} parent=11 // pred_check_branch
          %312 = sbr.rel (%p310) target = $region28
        $region27: #{tpu_custom_call.1} parent=11 // pred_region
          %s314 = ssub.s32 1024, 1024
          %315 = vsyncadd [#allocation9], %s314
          %s316 = sshll.u32 [#allocation8], 4
          %s317 = int_to_ptr.vmem [resolvable:$true] %s316
          %322 = dma.hbm_to_vmem [thread:$0]  %s4, 1024, %s317, [#allocation9], 64, 64, 4
        $region28: #{tpu_custom_call.1} parent=11 // pred_fallthru
          _
        // Predicated region
        $region29: #{tpu_custom_call.1} parent=11 // pred_check
          %p323 = pneg %p156
        $region30: #{tpu_custom_call.1} parent=11 // pred_check_branch
          %325 = sbr.rel (%p323) target = $region32
        $region31: #{tpu_custom_call.1} parent=11 // pred_region
          %s327 = ssub.s32 1024, 1024
          %328 = vsyncadd [#allocation9], %s327
          %s329 = sshll.u32 [#allocation10], 4
          %s330 = int_to_ptr.vmem [resolvable:$true] %s329
          %335 = dma.hbm_to_vmem [thread:$0]  %s5, 1024, %s330, [#allocation9], 64, 64, 4
        $region32: #{tpu_custom_call.1} parent=11 // pred_fallthru
          _
        // Predicated region
        $region33: #{tpu_custom_call.1} parent=11 // pred_check
          %p336 = pneg %p177
        $region34: #{tpu_custom_call.1} parent=11 // pred_check_branch
          %338 = sbr.rel (%p336) target = $region36
        $region35: #{tpu_custom_call.1} parent=11 // pred_region
          _
        $region36: #{tpu_custom_call.1} parent=11 // pred_fallthru
          _
        // Predicated region
        $region37: #{tpu_custom_call.1} parent=11 // pred_check
          %p339 = pneg %p198
        $region38: #{tpu_custom_call.1} parent=11 // pred_check_branch
          %341 = sbr.rel (%p339) target = $region40
        $region39: #{tpu_custom_call.1} parent=11 // pred_region
          %s343 = ssub.s32 1024, 1024
          %344 = vsyncadd [#allocation12], %s343
          %s345 = sshll.u32 [#allocation11], 4
          %s346 = int_to_ptr.vmem [resolvable:$true] %s345
          %351 = dma.hbm_to_vmem [thread:$0]  %s7, 1024, %s346, [#allocation12], 64, 64, 4
        $region40: #{tpu_custom_call.1} parent=11 // pred_fallthru
          _
        // Predicated region
        $region41: #{tpu_custom_call.1} parent=11 // pred_check
          %p352 = pneg %p219
        $region42: #{tpu_custom_call.1} parent=11 // pred_check_branch
          %354 = sbr.rel (%p352) target = $region44
        $region43: #{tpu_custom_call.1} parent=11 // pred_region
          %s356 = ssub.s32 1024, 1024
          %357 = vsyncadd [#allocation12], %s356
          %s358 = sshll.u32 [#allocation13], 4
          %s359 = int_to_ptr.vmem [resolvable:$true] %s358
          %364 = dma.hbm_to_vmem [thread:$0]  %s8, 1024, %s359, [#allocation12], 64, 64, 4
        $region44: #{tpu_custom_call.1} parent=11 // pred_fallthru
          _
        // Predicated region
        $region45: #{tpu_custom_call.1} parent=11 // pred_check
          %p365 = pneg %p240
        $region46: #{tpu_custom_call.1} parent=11 // pred_check_branch
          %367 = sbr.rel (%p365) target = $region48
        $region47: #{tpu_custom_call.1} parent=11 // pred_region
          _
        $region48: #{tpu_custom_call.1} parent=11 // pred_fallthru
          _
      $region12: #{tpu_custom_call.1} parent=5 // pred_fallthru
        _
      %p368 = scmp.lt.s32.totalorder %s25, 2
      // Predicated region
      $region49: #{tpu_custom_call.1} parent=5 // pred_check
        %p369 = pneg %p368
      $region50: #{tpu_custom_call.1} parent=5 // pred_check_branch
        %371 = sbr.rel (%p369) target = $region52
      $region51: #{tpu_custom_call.1} parent=5 // pred_region
        // Predicated region
        $region53: #{tpu_custom_call.1} parent=51 // pred_check
          %p372 = pneg %p45
        $region54: #{tpu_custom_call.1} parent=51 // pred_check_branch
          %374 = sbr.rel (%p372) target = $region56
        $region55: #{tpu_custom_call.1} parent=51 // pred_region
          %s375 = sand.u32 %s35, 1
          %s376 = scalar_lea.sflag [#allocation3], %s375
          %s377 = sand.u32 %s35, 1
          %s378 = smul.addr %s377, 64
          %s379 = scalar_lea.vmem [#allocation2], %s378
          %s380 = smul.u32 16, %s25
          %s382 = ssub.s32 1024, 1024
          %383 = vsyncadd %s376, %s382
          %s384 = smul.addr %s380, 64
          %s385 = scalar_lea.hbm %s0, %s384
          %s386 = sshll.u32 %s379, 4
          %s387 = int_to_ptr.vmem [resolvable:$true] %s386
          %392 = dma.hbm_to_vmem [thread:$0]  %s385, 1024, %s387, %s376, 64, 64, 4
        $region56: #{tpu_custom_call.1} parent=51 // pred_fallthru
          _
      $region52: #{tpu_custom_call.1} parent=5 // pred_fallthru
        _
      %p393 = scmp.le.s32.totalorder 1, %s25
      %p394 = scmp.lt.s32.totalorder %s25, 3
      %p395 = pnand %p393, %p394
      %p396 = pneg %p395
      // Predicated region
      $region57: #{tpu_custom_call.1} parent=5 // pred_check
        _
      $region58: #{tpu_custom_call.1} parent=5 // pred_check_branch
        %398 = sbr.rel (%p395) target = $region60
      $region59: #{tpu_custom_call.1} parent=5 // pred_region
        %s399 = ssub.s32 %s25, 1
        %s400 = sand.u32 %s38, 1
        %s401 = scalar_lea.sflag [#allocation3], %s400
        %s402 = sand.u32 %s38, 1
        %s403 = smul.addr %s402, 64
        %s404 = scalar_lea.vmem [#allocation2], %s403
        // Predicated region
        $region61: #{tpu_custom_call.1} parent=59 // pred_check
          %p405 = pneg %p51
        $region62: #{tpu_custom_call.1} parent=59 // pred_check_branch
          %407 = sbr.rel (%p405) target = $region64
        $region63: #{tpu_custom_call.1} parent=59 // pred_region
          %408 = dma.done %s401, 1024
        $region64: #{tpu_custom_call.1} parent=59 // pred_fallthru
          _
        // Predicated region
        $region65: #{tpu_custom_call.1} parent=59 // pred_check
          %p409 = pneg %p72
        $region66: #{tpu_custom_call.1} parent=59 // pred_check_branch
          %411 = sbr.rel (%p409) target = $region68
        $region67: #{tpu_custom_call.1} parent=59 // pred_region
          %412 = dma.done [#allocation6], 1024
        $region68: #{tpu_custom_call.1} parent=59 // pred_fallthru
          _
        // Predicated region
        $region69: #{tpu_custom_call.1} parent=59 // pred_check
          %p413 = pneg %p114
        $region70: #{tpu_custom_call.1} parent=59 // pred_check_branch
          %415 = sbr.rel (%p413) target = $region72
        $region71: #{tpu_custom_call.1} parent=59 // pred_region
          %416 = dma.done [#allocation6], 1024
        $region72: #{tpu_custom_call.1} parent=59 // pred_fallthru
          _
        // Predicated region
        $region73: #{tpu_custom_call.1} parent=59 // pred_check
          %p417 = pneg %p135
        $region74: #{tpu_custom_call.1} parent=59 // pred_check_branch
          %419 = sbr.rel (%p417) target = $region76
        $region75: #{tpu_custom_call.1} parent=59 // pred_region
          %420 = dma.done [#allocation9], 1024
        $region76: #{tpu_custom_call.1} parent=59 // pred_fallthru
          _
        // Predicated region
        $region77: #{tpu_custom_call.1} parent=59 // pred_check
          %p421 = pneg %p156
        $region78: #{tpu_custom_call.1} parent=59 // pred_check_branch
          %423 = sbr.rel (%p421) target = $region80
        $region79: #{tpu_custom_call.1} parent=59 // pred_region
          %424 = dma.done [#allocation9], 1024
        $region80: #{tpu_custom_call.1} parent=59 // pred_fallthru
          _
        // Predicated region
        $region81: #{tpu_custom_call.1} parent=59 // pred_check
          %p425 = pneg %p198
        $region82: #{tpu_custom_call.1} parent=59 // pred_check_branch
          %427 = sbr.rel (%p425) target = $region84
        $region83: #{tpu_custom_call.1} parent=59 // pred_region
          %428 = dma.done [#allocation12], 1024
        $region84: #{tpu_custom_call.1} parent=59 // pred_fallthru
          _
        // Predicated region
        $region85: #{tpu_custom_call.1} parent=59 // pred_check
          %p429 = pneg %p219
        $region86: #{tpu_custom_call.1} parent=59 // pred_check_branch
          %431 = sbr.rel (%p429) target = $region88
        $region87: #{tpu_custom_call.1} parent=59 // pred_region
          %432 = dma.done [#allocation12], 1024
        $region88: #{tpu_custom_call.1} parent=59 // pred_fallthru
          _
        %s433 = sand.u32 %s38, 1
        %s434 = scalar_lea.sflag [#allocation3], %s433
        %s435 = sand.u32 %s38, 1
        %s436 = smul.addr %s435, 64
        %s437 = scalar_lea.vmem [#allocation2], %s436
        %p438 = pneg %p51
        %p439 = pneg %p48
        %p440 = pneg %p72
        %p441 = pneg %p69
        %p442 = pneg %p93
        %p443 = pneg %p90
        %p444 = pneg %p114
        %p445 = pneg %p111
        %p446 = pneg %p135
        %p447 = pneg %p132
        %p448 = pneg %p156
        %p449 = pneg %p153
        %p450 = pneg %p177
        %p451 = pneg %p174
        %p452 = pneg %p198
        %p453 = pneg %p195
        %p454 = pneg %p219
        %p455 = pneg %p216
        %p456 = pneg %p240
        %p457 = pneg %p237
        %p458 = pneg %p266
        %p459 = pneg %p263
        %s460 = sand.u32 %s253, 1
        %s461 = scalar_lea.sflag [#allocation4], %s460
        %s462 = sand.u32 %s253, 1
        %s463 = smul.addr %s462, 128
        %s464 = scalar_lea.vmem [#allocation14], %s463
        %s465 = smul.u32 16, %s30
        %s466 = smul.u32 16, %s30
        %v468 = vld [vmem:[%s404] sm:$0xf]
        %v469 = vld [vmem:[%s404 + $0x4] sm:$0xf]
        %v470 = vld [vmem:[%s404 + $0x8] sm:$0xf]
        %v471 = vld [vmem:[%s404 + $0xc] sm:$0xf]
        %v472 = vld [vmem:[%s404 + $0x10] sm:$0xf]
        %v473 = vld [vmem:[%s404 + $0x14] sm:$0xf]
        %v474 = vld [vmem:[%s404 + $0x18] sm:$0xf]
        %v475 = vld [vmem:[%s404 + $0x1c] sm:$0xf]
        %v476 = vld [vmem:[%s404 + $0x20] sm:$0xf]
        %v477 = vld [vmem:[%s404 + $0x24] sm:$0xf]
        %v478 = vld [vmem:[%s404 + $0x28] sm:$0xf]
        %v479 = vld [vmem:[%s404 + $0x2c] sm:$0xf]
        %v480 = vld [vmem:[%s404 + $0x30] sm:$0xf]
        %v481 = vld [vmem:[%s404 + $0x34] sm:$0xf]
        %v482 = vld [vmem:[%s404 + $0x38] sm:$0xf]
        %v483 = vld [vmem:[%s404 + $0x3c] sm:$0xf]
        %v484 = vld [vmem:[#allocation5] sm:$0xf]
        %v485 = vld [vmem:[#allocation5 + $0x4] sm:$0xf]
        %v486 = vld [vmem:[#allocation5 + $0x8] sm:$0xf]
        %v487 = vld [vmem:[#allocation5 + $0xc] sm:$0xf]
        %v488 = vld [vmem:[#allocation5 + $0x10] sm:$0xf]
        %v489 = vld [vmem:[#allocation5 + $0x14] sm:$0xf]
        %v490 = vld [vmem:[#allocation5 + $0x18] sm:$0xf]
        %v491 = vld [vmem:[#allocation5 + $0x1c] sm:$0xf]
        %v492 = vld [vmem:[#allocation5 + $0x20] sm:$0xf]
        %v493 = vld [vmem:[#allocation5 + $0x24] sm:$0xf]
        %v494 = vld [vmem:[#allocation5 + $0x28] sm:$0xf]
        %v495 = vld [vmem:[#allocation5 + $0x2c] sm:$0xf]
        %v496 = vld [vmem:[#allocation5 + $0x30] sm:$0xf]
        %v497 = vld [vmem:[#allocation5 + $0x34] sm:$0xf]
        %v498 = vld [vmem:[#allocation5 + $0x38] sm:$0xf]
        %v499 = vld [vmem:[#allocation5 + $0x3c] sm:$0xf]
        %v500 = vld [vmem:[%s2] sm:$0x1]
        %v502 = vlaneseq
        %v503 = vshrl.u32 %v502, 7
        %v504 = vsub.s32 0, %v503
        %v505 = vrot.slane %v500, %v504
        %v523 = vunpack.c.l.b16 %v468
        %v524 = vunpack.c.l.b16 %v469
        %v525 = vunpack.c.l.b16 %v470
        %v526 = vunpack.c.l.b16 %v471
        %v527 = vunpack.c.l.b16 %v472
        %v528 = vunpack.c.l.b16 %v473
        %v529 = vunpack.c.l.b16 %v474
        %v530 = vunpack.c.l.b16 %v475
        %v531 = vunpack.c.l.b16 %v476
        %v532 = vunpack.c.l.b16 %v477
        %v533 = vunpack.c.l.b16 %v478
        %v534 = vunpack.c.l.b16 %v479
        %v535 = vunpack.c.l.b16 %v480
        %v536 = vunpack.c.l.b16 %v481
        %v537 = vunpack.c.l.b16 %v482
        %v538 = vunpack.c.l.b16 %v483
        %v539 = vpack.c.b16 %v524, %v523
        %v540 = vpack.c.b16 %v526, %v525
        %v541 = vpack.c.b16 %v528, %v527
        %v542 = vpack.c.b16 %v530, %v529
        %v543 = vpack.c.b16 %v532, %v531
        %v544 = vpack.c.b16 %v534, %v533
        %v545 = vpack.c.b16 %v536, %v535
        %v546 = vpack.c.b16 %v538, %v537
        %v571 = vunpack.c.l.b16 %v484
        %v572 = vunpack.c.l.b16 %v485
        %v573 = vunpack.c.l.b16 %v486
        %v574 = vunpack.c.l.b16 %v487
        %v575 = vunpack.c.l.b16 %v488
        %v576 = vunpack.c.l.b16 %v489
        %v577 = vunpack.c.l.b16 %v490
        %v578 = vunpack.c.l.b16 %v491
        %v579 = vunpack.c.l.b16 %v492
        %v580 = vunpack.c.l.b16 %v493
        %v581 = vunpack.c.l.b16 %v494
        %v582 = vunpack.c.l.b16 %v495
        %v583 = vunpack.c.l.b16 %v496
        %v584 = vunpack.c.l.b16 %v497
        %v585 = vunpack.c.l.b16 %v498
        %v586 = vunpack.c.l.b16 %v499
        %v587 = vpack.c.b16 %v572, %v571
        %v588 = vpack.c.b16 %v574, %v573
        %v589 = vpack.c.b16 %v576, %v575
        %v590 = vpack.c.b16 %v578, %v577
        %v591 = vpack.c.b16 %v580, %v579
        %v592 = vpack.c.b16 %v582, %v581
        %v593 = vpack.c.b16 %v584, %v583
        %v594 = vpack.c.b16 %v586, %v585
        %603 = vmatprep.subr.bf16.mxu0 0
        %604 = vmatpush1.bf16.msra.mxu0 %v594
        %605 = vmatprep.subr.bf16.mxu0 0
        %606 = vmatpush1.bf16.msra.mxu0 %v593
        %607 = vmatprep.subr.bf16.mxu0 0
        %608 = vmatpush1.bf16.msra.mxu0 %v592
        %609 = vmatprep.subr.bf16.mxu0 0
        %610 = vmatpush1.bf16.msra.mxu0 %v591
        %611 = vmatprep.subr.bf16.mxu0 0
        %612 = vmatpush1.bf16.msra.mxu0 %v590
        %613 = vmatprep.subr.bf16.mxu0 0
        %614 = vmatpush1.bf16.msra.mxu0 %v589
        %615 = vmatprep.subr.bf16.mxu0 0
        %616 = vmatpush1.bf16.msra.mxu0 %v588
        %617 = vmatprep.subr.bf16.mxu0 0
        %618 = vmatpush1.bf16.msra.mxu0 %v587
        %619 = vmatprep.subr.bf16.mxu0 0
        %620 = vmatpush2.bf16.msra.mxu0 0
        %621 = vmatprep.subr.bf16.mxu0 0
        %622 = vmatpush2.bf16.msra.mxu0 0
        %623 = vmatprep.subr.bf16.mxu0 0
        %624 = vmatpush2.bf16.msra.mxu0 0
        %625 = vmatprep.subr.bf16.mxu0 0
        %626 = vmatpush2.bf16.msra.mxu0 0
        %627 = vmatprep.subr.bf16.mxu0 0
        %628 = vmatpush2.bf16.msra.mxu0 0
        %629 = vmatprep.subr.bf16.mxu0 0
        %630 = vmatpush2.bf16.msra.mxu0 0
        %631 = vmatprep.subr.bf16.mxu0 0
        %632 = vmatpush2.bf16.msra.mxu0 0
        %633 = vmatprep.subr.bf16.mxu0 0
        %634 = vmatpush2.bf16.msra.mxu0 0
        %635 = vmatprep.mubr.bf16.mxu0 0
        %636 = vmatmul.mubr.bf16.gmra.mxu0 %v539
        %v637 = vpop.f32.mrf.mxu0
        %v638 = vadd.f32 %v505, %v637
        %v639 = vpop.f32.mrf.mxu0
        %v640 = vpop.f32.mrf.mxu0
        %v641 = vadd.f32 %v505, %v640
        %v642 = vpop.f32.mrf.mxu0
        %643 = vmatprep.mubr.bf16.mxu0 0
        %644 = vmatmul.mubr.bf16.gmra.mxu0 %v540
        %v645 = vpop.f32.mrf.mxu0
        %v646 = vadd.f32 %v505, %v645
        %v647 = vpop.f32.mrf.mxu0
        %v648 = vpop.f32.mrf.mxu0
        %v649 = vadd.f32 %v505, %v648
        %v650 = vpop.f32.mrf.mxu0
        %651 = vmatprep.mubr.bf16.mxu0 0
        %652 = vmatmul.mubr.bf16.gmra.mxu0 %v541
        %v653 = vpop.f32.mrf.mxu0
        %v654 = vadd.f32 %v505, %v653
        %v655 = vpop.f32.mrf.mxu0
        %v656 = vpop.f32.mrf.mxu0
        %v657 = vadd.f32 %v505, %v656
        %v658 = vpop.f32.mrf.mxu0
        %659 = vmatprep.mubr.bf16.mxu0 0
        %660 = vmatmul.mubr.bf16.gmra.mxu0 %v542
        %v661 = vpop.f32.mrf.mxu0
        %v662 = vadd.f32 %v505, %v661
        %v663 = vpop.f32.mrf.mxu0
        %v664 = vpop.f32.mrf.mxu0
        %v665 = vadd.f32 %v505, %v664
        %v666 = vpop.f32.mrf.mxu0
        %667 = vmatprep.mubr.bf16.mxu0 0
        %668 = vmatmul.mubr.bf16.gmra.mxu0 %v543
        %v669 = vpop.f32.mrf.mxu0
        %v670 = vadd.f32 %v505, %v669
        %v671 = vpop.f32.mrf.mxu0
        %v672 = vpop.f32.mrf.mxu0
        %v673 = vadd.f32 %v505, %v672
        %v674 = vpop.f32.mrf.mxu0
        %675 = vmatprep.mubr.bf16.mxu0 0
        %676 = vmatmul.mubr.bf16.gmra.mxu0 %v544
        %v677 = vpop.f32.mrf.mxu0
        %v678 = vadd.f32 %v505, %v677
        %v679 = vpop.f32.mrf.mxu0
        %v680 = vpop.f32.mrf.mxu0
        %v681 = vadd.f32 %v505, %v680
        %v682 = vpop.f32.mrf.mxu0
        %683 = vmatprep.mubr.bf16.mxu0 0
        %684 = vmatmul.mubr.bf16.gmra.mxu0 %v545
        %v685 = vpop.f32.mrf.mxu0
        %v686 = vadd.f32 %v505, %v685
        %v687 = vpop.f32.mrf.mxu0
        %v688 = vpop.f32.mrf.mxu0
        %v689 = vadd.f32 %v505, %v688
        %v690 = vpop.f32.mrf.mxu0
        %691 = vmatprep.mubr.bf16.mxu0 0
        %692 = vmatmul.mubr.bf16.gmra.mxu0 %v546
        %v693 = vpop.f32.mrf.mxu0
        %v694 = vadd.f32 %v505, %v693
        %v695 = vpop.f32.mrf.mxu0
        %v696 = vpop.f32.mrf.mxu0
        %v697 = vadd.f32 %v505, %v696
        %v698 = vpop.f32.mrf.mxu0
        %699 = vdwg.mxu0
        %v700 = vsub.f32 0.0, %v638
        %v701 = vsub.f32 0.0, %v641
        %v702 = vsub.f32 0.0, %v646
        %v703 = vsub.f32 0.0, %v649
        %v704 = vsub.f32 0.0, %v654
        %v705 = vsub.f32 0.0, %v657
        %v706 = vsub.f32 0.0, %v662
        %v707 = vsub.f32 0.0, %v665
        %v708 = vsub.f32 0.0, %v670
        %v709 = vsub.f32 0.0, %v673
        %v710 = vsub.f32 0.0, %v678
        %v711 = vsub.f32 0.0, %v681
        %v712 = vsub.f32 0.0, %v686
        %v713 = vsub.f32 0.0, %v689
        %v714 = vsub.f32 0.0, %v694
        %v715 = vsub.f32 0.0, %v697
        %v716 = vmul.f32 %v700, 1.442695
        %v717 = vpow.pop %v716
        %v718 = vmul.f32 %v701, 1.442695
        %v719 = vpow.pop %v718
        %v720 = vmul.f32 %v702, 1.442695
        %v721 = vpow.pop %v720
        %v722 = vmul.f32 %v703, 1.442695
        %v723 = vpow.pop %v722
        %v724 = vmul.f32 %v704, 1.442695
        %v725 = vpow.pop %v724
        %v726 = vmul.f32 %v705, 1.442695
        %v727 = vpow.pop %v726
        %v728 = vmul.f32 %v706, 1.442695
        %v729 = vpow.pop %v728
        %v730 = vmul.f32 %v707, 1.442695
        %v731 = vpow.pop %v730
        %v732 = vmul.f32 %v708, 1.442695
        %v733 = vpow.pop %v732
        %v734 = vmul.f32 %v709, 1.442695
        %v735 = vpow.pop %v734
        %v736 = vmul.f32 %v710, 1.442695
        %v737 = vpow.pop %v736
        %v738 = vmul.f32 %v711, 1.442695
        %v739 = vpow.pop %v738
        %v740 = vmul.f32 %v712, 1.442695
        %v741 = vpow.pop %v740
        %v742 = vmul.f32 %v713, 1.442695
        %v743 = vpow.pop %v742
        %v744 = vmul.f32 %v714, 1.442695
        %v745 = vpow.pop %v744
        %v746 = vmul.f32 %v715, 1.442695
        %v747 = vpow.pop %v746
        %v748 = vadd.f32 %v717, 1.0
        %v749 = vadd.f32 %v719, 1.0
        %v750 = vadd.f32 %v721, 1.0
        %v751 = vadd.f32 %v723, 1.0
        %v752 = vadd.f32 %v725, 1.0
        %v753 = vadd.f32 %v727, 1.0
        %v754 = vadd.f32 %v729, 1.0
        %v755 = vadd.f32 %v731, 1.0
        %v756 = vadd.f32 %v733, 1.0
        %v757 = vadd.f32 %v735, 1.0
        %v758 = vadd.f32 %v737, 1.0
        %v759 = vadd.f32 %v739, 1.0
        %v760 = vadd.f32 %v741, 1.0
        %v761 = vadd.f32 %v743, 1.0
        %v762 = vadd.f32 %v745, 1.0
        %v763 = vadd.f32 %v747, 1.0
        %v764 = vrcp.pop %v748
        %v765 = vrcp.pop %v749
        %v766 = vrcp.pop %v750
        %v767 = vrcp.pop %v751
        %v768 = vrcp.pop %v752
        %v769 = vrcp.pop %v753
        %v770 = vrcp.pop %v754
        %v771 = vrcp.pop %v755
        %v772 = vrcp.pop %v756
        %v773 = vrcp.pop %v757
        %v774 = vrcp.pop %v758
        %v775 = vrcp.pop %v759
        %v776 = vrcp.pop %v760
        %v777 = vrcp.pop %v761
        %v778 = vrcp.pop %v762
        %v779 = vrcp.pop %v763
        %v780 = vmul.f32 %v638, %v764
        %v781 = vmul.f32 %v641, %v765
        %v782 = vmul.f32 %v646, %v766
        %v783 = vmul.f32 %v649, %v767
        %v784 = vmul.f32 %v654, %v768
        %v785 = vmul.f32 %v657, %v769
        %v786 = vmul.f32 %v662, %v770
        %v787 = vmul.f32 %v665, %v771
        %v788 = vmul.f32 %v670, %v772
        %v789 = vmul.f32 %v673, %v773
        %v790 = vmul.f32 %v678, %v774
        %v791 = vmul.f32 %v681, %v775
        %v792 = vmul.f32 %v686, %v776
        %v793 = vmul.f32 %v689, %v777
        %v794 = vmul.f32 %v694, %v778
        %v795 = vmul.f32 %v697, %v779
        %v796 = vlaneseq
        %v797 = vshrl.u32 %v796, 7
        %v798 = vadd.s32 %v797, 8
        %v799 = vadd.s32 %v797, 16
        %v800 = vadd.s32 %v797, 24
        %v801 = vadd.s32 %v797, 32
        %v802 = vadd.s32 %v797, 40
        %v803 = vadd.s32 %v797, 48
        %v804 = vadd.s32 %v797, 56
        %v805 = vadd.s32 %v797, 64
        %v806 = vadd.s32 %v797, 72
        %v807 = vadd.s32 %v797, 80
        %v808 = vadd.s32 %v797, 88
        %v809 = vadd.s32 %v797, 96
        %v810 = vadd.s32 %v797, 104
        %v811 = vadd.s32 %v797, 112
        %v812 = vadd.s32 %v797, 120
        %vm813 = vcmp.lt.s32.totalorder %v797, 0
        %v814 = vsub.s32 0, %v797
        %v815 = vsel %vm813, %v814, %v797
        %v816 = vshrl.u32 %v815, 6
        %v817 = vand.u32 %v815, 63
        %v818 = vsub.s32 0, %v817
        %v819 = vsel %vm813, %v818, %v817
        %vm820 = vcmp.lt.s32.totalorder %v798, 0
        %v821 = vsub.s32 0, %v798
        %v822 = vsel %vm820, %v821, %v798
        %v823 = vshrl.u32 %v822, 6
        %v824 = vand.u32 %v822, 63
        %v825 = vsub.s32 0, %v824
        %v826 = vsel %vm820, %v825, %v824
        %vm827 = vcmp.lt.s32.totalorder %v799, 0
        %v828 = vsub.s32 0, %v799
        %v829 = vsel %vm827, %v828, %v799
        %v830 = vshrl.u32 %v829, 6
        %v831 = vand.u32 %v829, 63
        %v832 = vsub.s32 0, %v831
        %v833 = vsel %vm827, %v832, %v831
        %vm834 = vcmp.lt.s32.totalorder %v800, 0
        %v835 = vsub.s32 0, %v800
        %v836 = vsel %vm834, %v835, %v800
        %v837 = vshrl.u32 %v836, 6
        %v838 = vand.u32 %v836, 63
        %v839 = vsub.s32 0, %v838
        %v840 = vsel %vm834, %v839, %v838
        %vm841 = vcmp.lt.s32.totalorder %v801, 0
        %v842 = vsub.s32 0, %v801
        %v843 = vsel %vm841, %v842, %v801
        %v844 = vshrl.u32 %v843, 6
        %v845 = vand.u32 %v843, 63
        %v846 = vsub.s32 0, %v845
        %v847 = vsel %vm841, %v846, %v845
        %vm848 = vcmp.lt.s32.totalorder %v802, 0
        %v849 = vsub.s32 0, %v802
        %v850 = vsel %vm848, %v849, %v802
        %v851 = vshrl.u32 %v850, 6
        %v852 = vand.u32 %v850, 63
        %v853 = vsub.s32 0, %v852
        %v854 = vsel %vm848, %v853, %v852
        %vm855 = vcmp.lt.s32.totalorder %v803, 0
        %v856 = vsub.s32 0, %v803
        %v857 = vsel %vm855, %v856, %v803
        %v858 = vshrl.u32 %v857, 6
        %v859 = vand.u32 %v857, 63
        %v860 = vsub.s32 0, %v859
        %v861 = vsel %vm855, %v860, %v859
        %vm862 = vcmp.lt.s32.totalorder %v804, 0
        %v863 = vsub.s32 0, %v804
        %v864 = vsel %vm862, %v863, %v804
        %v865 = vshrl.u32 %v864, 6
        %v866 = vand.u32 %v864, 63
        %v867 = vsub.s32 0, %v866
        %v868 = vsel %vm862, %v867, %v866
        %vm869 = vcmp.lt.s32.totalorder %v805, 0
        %v870 = vsub.s32 0, %v805
        %v871 = vsel %vm869, %v870, %v805
        %v872 = vshrl.u32 %v871, 6
        %v873 = vand.u32 %v871, 63
        %v874 = vsub.s32 0, %v873
        %v875 = vsel %vm869, %v874, %v873
        %vm876 = vcmp.lt.s32.totalorder %v806, 0
        %v877 = vsub.s32 0, %v806
        %v878 = vsel %vm876, %v877, %v806
        %v879 = vshrl.u32 %v878, 6
        %v880 = vand.u32 %v878, 63
        %v881 = vsub.s32 0, %v880
        %v882 = vsel %vm876, %v881, %v880
        %vm883 = vcmp.lt.s32.totalorder %v807, 0
        %v884 = vsub.s32 0, %v807
        %v885 = vsel %vm883, %v884, %v807
        %v886 = vshrl.u32 %v885, 6
        %v887 = vand.u32 %v885, 63
        %v888 = vsub.s32 0, %v887
        %v889 = vsel %vm883, %v888, %v887
        %vm890 = vcmp.lt.s32.totalorder %v808, 0
        %v891 = vsub.s32 0, %v808
        %v892 = vsel %vm890, %v891, %v808
        %v893 = vshrl.u32 %v892, 6
        %v894 = vand.u32 %v892, 63
        %v895 = vsub.s32 0, %v894
        %v896 = vsel %vm890, %v895, %v894
        %vm897 = vcmp.lt.s32.totalorder %v809, 0
        %v898 = vsub.s32 0, %v809
        %v899 = vsel %vm897, %v898, %v809
        %v900 = vshrl.u32 %v899, 6
        %v901 = vand.u32 %v899, 63
        %v902 = vsub.s32 0, %v901
        %v903 = vsel %vm897, %v902, %v901
        %vm904 = vcmp.lt.s32.totalorder %v810, 0
        %v905 = vsub.s32 0, %v810
        %v906 = vsel %vm904, %v905, %v810
        %v907 = vshrl.u32 %v906, 6
        %v908 = vand.u32 %v906, 63
        %v909 = vsub.s32 0, %v908
        %v910 = vsel %vm904, %v909, %v908
        %vm911 = vcmp.lt.s32.totalorder %v811, 0
        %v912 = vsub.s32 0, %v811
        %v913 = vsel %vm911, %v912, %v811
        %v914 = vshrl.u32 %v913, 6
        %v915 = vand.u32 %v913, 63
        %v916 = vsub.s32 0, %v915
        %v917 = vsel %vm911, %v916, %v915
        %vm918 = vcmp.lt.s32.totalorder %v812, 0
        %v919 = vsub.s32 0, %v812
        %v920 = vsel %vm918, %v919, %v812
        %v921 = vshrl.u32 %v920, 6
        %v922 = vand.u32 %v920, 63
        %v923 = vsub.s32 0, %v922
        %v924 = vsel %vm918, %v923, %v922
        %vm925 = vcmp.ne.s32.totalorder %v819, 0
        %vm926 = vcmp.ne.s32.totalorder %v826, 0
        %vm927 = vcmp.ne.s32.totalorder %v833, 0
        %vm928 = vcmp.ne.s32.totalorder %v840, 0
        %vm929 = vcmp.ne.s32.totalorder %v847, 0
        %vm930 = vcmp.ne.s32.totalorder %v854, 0
        %vm931 = vcmp.ne.s32.totalorder %v861, 0
        %vm932 = vcmp.ne.s32.totalorder %v868, 0
        %vm933 = vcmp.ne.s32.totalorder %v875, 0
        %vm934 = vcmp.ne.s32.totalorder %v882, 0
        %vm935 = vcmp.ne.s32.totalorder %v889, 0
        %vm936 = vcmp.ne.s32.totalorder %v896, 0
        %vm937 = vcmp.ne.s32.totalorder %v903, 0
        %vm938 = vcmp.ne.s32.totalorder %v910, 0
        %vm939 = vcmp.ne.s32.totalorder %v917, 0
        %vm940 = vcmp.ne.s32.totalorder %v924, 0
        %vm941 = vcmp.lt.s32.totalorder %v819, 0
        %vm942 = vcmp.lt.s32.totalorder %v826, 0
        %vm943 = vcmp.lt.s32.totalorder %v833, 0
        %vm944 = vcmp.lt.s32.totalorder %v840, 0
        %vm945 = vcmp.lt.s32.totalorder %v847, 0
        %vm946 = vcmp.lt.s32.totalorder %v854, 0
        %vm947 = vcmp.lt.s32.totalorder %v861, 0
        %vm948 = vcmp.lt.s32.totalorder %v868, 0
        %vm949 = vcmp.lt.s32.totalorder %v875, 0
        %vm950 = vcmp.lt.s32.totalorder %v882, 0
        %vm951 = vcmp.lt.s32.totalorder %v889, 0
        %vm952 = vcmp.lt.s32.totalorder %v896, 0
        %vm953 = vcmp.lt.s32.totalorder %v903, 0
        %vm954 = vcmp.lt.s32.totalorder %v910, 0
        %vm955 = vcmp.lt.s32.totalorder %v917, 0
        %vm956 = vcmp.lt.s32.totalorder %v924, 0
        %vm957 = vmand %vm941, %vm925
        %vm958 = vmand %vm942, %vm926
        %vm959 = vmand %vm943, %vm927
        %vm960 = vmand %vm944, %vm928
        %vm961 = vmand %vm945, %vm929
        %vm962 = vmand %vm946, %vm930
        %vm963 = vmand %vm947, %vm931
        %vm964 = vmand %vm948, %vm932
        %vm965 = vmand %vm949, %vm933
        %vm966 = vmand %vm950, %vm934
        %vm967 = vmand %vm951, %vm935
        %vm968 = vmand %vm952, %vm936
        %vm969 = vmand %vm953, %vm937
        %vm970 = vmand %vm954, %vm938
        %vm971 = vmand %vm955, %vm939
        %vm972 = vmand %vm956, %vm940
        %v973 = vadd.s32 %v819, 64
        %v974 = vadd.s32 %v826, 64
        %v975 = vadd.s32 %v833, 64
        %v976 = vadd.s32 %v840, 64
        %v977 = vadd.s32 %v847, 64
        %v978 = vadd.s32 %v854, 64
        %v979 = vadd.s32 %v861, 64
        %v980 = vadd.s32 %v868, 64
        %v981 = vadd.s32 %v875, 64
        %v982 = vadd.s32 %v882, 64
        %v983 = vadd.s32 %v889, 64
        %v984 = vadd.s32 %v896, 64
        %v985 = vadd.s32 %v903, 64
        %v986 = vadd.s32 %v910, 64
        %v987 = vadd.s32 %v917, 64
        %v988 = vadd.s32 %v924, 64
        %v989 = vsel %vm957, %v973, %v819
        %v990 = vsel %vm958, %v974, %v826
        %v991 = vsel %vm959, %v975, %v833
        %v992 = vsel %vm960, %v976, %v840
        %v993 = vsel %vm961, %v977, %v847
        %v994 = vsel %vm962, %v978, %v854
        %v995 = vsel %vm963, %v979, %v861
        %v996 = vsel %vm964, %v980, %v868
        %v997 = vsel %vm965, %v981, %v875
        %v998 = vsel %vm966, %v982, %v882
        %v999 = vsel %vm967, %v983, %v889
        %v1000 = vsel %vm968, %v984, %v896
        %v1001 = vsel %vm969, %v985, %v903
        %v1002 = vsel %vm970, %v986, %v910
        %v1003 = vsel %vm971, %v987, %v917
        %v1004 = vsel %vm972, %v988, %v924
        %vm1005 = vcmp.eq.s32.totalorder %v989, 0
        %vm1006 = vcmp.eq.s32.totalorder %v990, 0
        %vm1007 = vcmp.eq.s32.totalorder %v991, 0
        %vm1008 = vcmp.eq.s32.totalorder %v992, 0
        %vm1009 = vcmp.eq.s32.totalorder %v993, 0
        %vm1010 = vcmp.eq.s32.totalorder %v994, 0
        %vm1011 = vcmp.eq.s32.totalorder %v995, 0
        %vm1012 = vcmp.eq.s32.totalorder %v996, 0
        %vm1013 = vcmp.eq.s32.totalorder %v997, 0
        %vm1014 = vcmp.eq.s32.totalorder %v998, 0
        %vm1015 = vcmp.eq.s32.totalorder %v999, 0
        %vm1016 = vcmp.eq.s32.totalorder %v1000, 0
        %vm1017 = vcmp.eq.s32.totalorder %v1001, 0
        %vm1018 = vcmp.eq.s32.totalorder %v1002, 0
        %vm1019 = vcmp.eq.s32.totalorder %v1003, 0
        %vm1020 = vcmp.eq.s32.totalorder %v1004, 0
        %v1021 = vrot.slane %v780, 7
        %v1022 = vrot.slane %v781, 7
        %v1023 = vrot.slane %v782, 7
        %v1024 = vrot.slane %v783, 7
        %v1025 = vrot.slane %v784, 7
        %v1026 = vrot.slane %v785, 7
        %v1027 = vrot.slane %v786, 7
        %v1028 = vrot.slane %v787, 7
        %v1029 = vrot.slane %v788, 7
        %v1030 = vrot.slane %v789, 7
        %v1031 = vrot.slane %v790, 7
        %v1032 = vrot.slane %v791, 7
        %v1033 = vrot.slane %v792, 7
        %v1034 = vrot.slane %v793, 7
        %v1035 = vrot.slane %v794, 7
        %v1036 = vrot.slane %v795, 7
        %vm1037 = vcmp.lt.s32.totalorder %v797, 1
        %v1038 = vsel %vm1037, %v1035, %v1036
        %v1039 = vsel %vm1037, %v1034, %v1035
        %v1040 = vsel %vm1037, %v1033, %v1034
        %v1041 = vsel %vm1037, %v1032, %v1033
        %v1042 = vsel %vm1037, %v1031, %v1032
        %v1043 = vsel %vm1037, %v1030, %v1031
        %v1044 = vsel %vm1037, %v1029, %v1030
        %v1045 = vsel %vm1037, %v1028, %v1029
        %v1046 = vsel %vm1037, %v1027, %v1028
        %v1047 = vsel %vm1037, %v1026, %v1027
        %v1048 = vsel %vm1037, %v1025, %v1026
        %v1049 = vsel %vm1037, %v1024, %v1025
        %v1050 = vsel %vm1037, %v1023, %v1024
        %v1051 = vsel %vm1037, %v1022, %v1023
        %v1052 = vsel %vm1037, %v1021, %v1022
        %v1053 = vsel %vm1037, %v1036, %v1021
        %v1054 = vsel %vm1005, 1, 0
        %v1055 = vsel %vm1006, 1, 0
        %v1056 = vsel %vm1007, 1, 0
        %v1057 = vsel %vm1008, 1, 0
        %v1058 = vsel %vm1009, 1, 0
        %v1059 = vsel %vm1010, 1, 0
        %v1060 = vsel %vm1011, 1, 0
        %v1061 = vsel %vm1012, 1, 0
        %v1062 = vsel %vm1013, 1, 0
        %v1063 = vsel %vm1014, 1, 0
        %v1064 = vsel %vm1015, 1, 0
        %v1065 = vsel %vm1016, 1, 0
        %v1066 = vsel %vm1017, 1, 0
        %v1067 = vsel %vm1018, 1, 0
        %v1068 = vsel %vm1019, 1, 0
        %v1069 = vsel %vm1020, 1, 0
        %vm1070 = vcmp.eq.s32.totalorder %v1054, 1
        %vm1071 = vcmp.eq.s32.totalorder %v1055, 1
        %vm1072 = vcmp.eq.s32.totalorder %v1056, 1
        %vm1073 = vcmp.eq.s32.totalorder %v1057, 1
        %vm1074 = vcmp.eq.s32.totalorder %v1058, 1
        %vm1075 = vcmp.eq.s32.totalorder %v1059, 1
        %vm1076 = vcmp.eq.s32.totalorder %v1060, 1
        %vm1077 = vcmp.eq.s32.totalorder %v1061, 1
        %vm1078 = vcmp.eq.s32.totalorder %v1062, 1
        %vm1079 = vcmp.eq.s32.totalorder %v1063, 1
        %vm1080 = vcmp.eq.s32.totalorder %v1064, 1
        %vm1081 = vcmp.eq.s32.totalorder %v1065, 1
        %vm1082 = vcmp.eq.s32.totalorder %v1066, 1
        %vm1083 = vcmp.eq.s32.totalorder %v1067, 1
        %vm1084 = vcmp.eq.s32.totalorder %v1068, 1
        %vm1085 = vcmp.eq.s32.totalorder %v1069, 1
        %v1086 = vsel %vm1070, 0.0, %v1053
        %v1087 = vsel %vm1071, 0.0, %v1052
        %v1088 = vsel %vm1072, 0.0, %v1051
        %v1089 = vsel %vm1073, 0.0, %v1050
        %v1090 = vsel %vm1074, 0.0, %v1049
        %v1091 = vsel %vm1075, 0.0, %v1048
        %v1092 = vsel %vm1076, 0.0, %v1047
        %v1093 = vsel %vm1077, 0.0, %v1046
        %v1094 = vsel %vm1078, 0.0, %v1045
        %v1095 = vsel %vm1079, 0.0, %v1044
        %v1096 = vsel %vm1080, 0.0, %v1043
        %v1097 = vsel %vm1081, 0.0, %v1042
        %v1098 = vsel %vm1082, 0.0, %v1041
        %v1099 = vsel %vm1083, 0.0, %v1040
        %v1100 = vsel %vm1084, 0.0, %v1039
        %v1101 = vsel %vm1085, 0.0, %v1038
        %vm1102 = vcmp.eq.s32.totalorder %v989, 63
        %vm1103 = vcmp.eq.s32.totalorder %v990, 63
        %vm1104 = vcmp.eq.s32.totalorder %v991, 63
        %vm1105 = vcmp.eq.s32.totalorder %v992, 63
        %vm1106 = vcmp.eq.s32.totalorder %v993, 63
        %vm1107 = vcmp.eq.s32.totalorder %v994, 63
        %vm1108 = vcmp.eq.s32.totalorder %v995, 63
        %vm1109 = vcmp.eq.s32.totalorder %v996, 63
        %vm1110 = vcmp.eq.s32.totalorder %v997, 63
        %vm1111 = vcmp.eq.s32.totalorder %v998, 63
        %vm1112 = vcmp.eq.s32.totalorder %v999, 63
        %vm1113 = vcmp.eq.s32.totalorder %v1000, 63
        %vm1114 = vcmp.eq.s32.totalorder %v1001, 63
        %vm1115 = vcmp.eq.s32.totalorder %v1002, 63
        %vm1116 = vcmp.eq.s32.totalorder %v1003, 63
        %vm1117 = vcmp.eq.s32.totalorder %v1004, 63
        %v1118 = vrot.slane %v780, 1
        %v1119 = vrot.slane %v781, 1
        %v1120 = vrot.slane %v782, 1
        %v1121 = vrot.slane %v783, 1
        %v1122 = vrot.slane %v784, 1
        %v1123 = vrot.slane %v785, 1
        %v1124 = vrot.slane %v786, 1
        %v1125 = vrot.slane %v787, 1
        %v1126 = vrot.slane %v788, 1
        %v1127 = vrot.slane %v789, 1
        %v1128 = vrot.slane %v790, 1
        %v1129 = vrot.slane %v791, 1
        %v1130 = vrot.slane %v792, 1
        %v1131 = vrot.slane %v793, 1
        %v1132 = vrot.slane %v794, 1
        %v1133 = vrot.slane %v795, 1
        %vm1134 = vcmp.lt.s32.totalorder %v797, 7
        %v1135 = vsel %vm1134, %v1132, %v1133
        %v1136 = vsel %vm1134, %v1131, %v1132
        %v1137 = vsel %vm1134, %v1130, %v1131
        %v1138 = vsel %vm1134, %v1129, %v1130
        %v1139 = vsel %vm1134, %v1128, %v1129
        %v1140 = vsel %vm1134, %v1127, %v1128
        %v1141 = vsel %vm1134, %v1126, %v1127
        %v1142 = vsel %vm1134, %v1125, %v1126
        %v1143 = vsel %vm1134, %v1124, %v1125
        %v1144 = vsel %vm1134, %v1123, %v1124
        %v1145 = vsel %vm1134, %v1122, %v1123
        %v1146 = vsel %vm1134, %v1121, %v1122
        %v1147 = vsel %vm1134, %v1120, %v1121
        %v1148 = vsel %vm1134, %v1119, %v1120
        %v1149 = vsel %vm1134, %v1118, %v1119
        %v1150 = vsel %vm1134, %v1133, %v1118
        %v1151 = vsel %vm1102, 1, 0
        %v1152 = vsel %vm1103, 1, 0
        %v1153 = vsel %vm1104, 1, 0
        %v1154 = vsel %vm1105, 1, 0
        %v1155 = vsel %vm1106, 1, 0
        %v1156 = vsel %vm1107, 1, 0
        %v1157 = vsel %vm1108, 1, 0
        %v1158 = vsel %vm1109, 1, 0
        %v1159 = vsel %vm1110, 1, 0
        %v1160 = vsel %vm1111, 1, 0
        %v1161 = vsel %vm1112, 1, 0
        %v1162 = vsel %vm1113, 1, 0
        %v1163 = vsel %vm1114, 1, 0
        %v1164 = vsel %vm1115, 1, 0
        %v1165 = vsel %vm1116, 1, 0
        %v1166 = vsel %vm1117, 1, 0
        %vm1167 = vcmp.eq.s32.totalorder %v1151, 1
        %vm1168 = vcmp.eq.s32.totalorder %v1152, 1
        %vm1169 = vcmp.eq.s32.totalorder %v1153, 1
        %vm1170 = vcmp.eq.s32.totalorder %v1154, 1
        %vm1171 = vcmp.eq.s32.totalorder %v1155, 1
        %vm1172 = vcmp.eq.s32.totalorder %v1156, 1
        %vm1173 = vcmp.eq.s32.totalorder %v1157, 1
        %vm1174 = vcmp.eq.s32.totalorder %v1158, 1
        %vm1175 = vcmp.eq.s32.totalorder %v1159, 1
        %vm1176 = vcmp.eq.s32.totalorder %v1160, 1
        %vm1177 = vcmp.eq.s32.totalorder %v1161, 1
        %vm1178 = vcmp.eq.s32.totalorder %v1162, 1
        %vm1179 = vcmp.eq.s32.totalorder %v1163, 1
        %vm1180 = vcmp.eq.s32.totalorder %v1164, 1
        %vm1181 = vcmp.eq.s32.totalorder %v1165, 1
        %vm1182 = vcmp.eq.s32.totalorder %v1166, 1
        %v1183 = vsel %vm1167, 0.0, %v1149
        %v1184 = vsel %vm1168, 0.0, %v1148
        %v1185 = vsel %vm1169, 0.0, %v1147
        %v1186 = vsel %vm1170, 0.0, %v1146
        %v1187 = vsel %vm1171, 0.0, %v1145
        %v1188 = vsel %vm1172, 0.0, %v1144
        %v1189 = vsel %vm1173, 0.0, %v1143
        %v1190 = vsel %vm1174, 0.0, %v1142
        %v1191 = vsel %vm1175, 0.0, %v1141
        %v1192 = vsel %vm1176, 0.0, %v1140
        %v1193 = vsel %vm1177, 0.0, %v1139
        %v1194 = vsel %vm1178, 0.0, %v1138
        %v1195 = vsel %vm1179, 0.0, %v1137
        %v1196 = vsel %vm1180, 0.0, %v1136
        %v1197 = vsel %vm1181, 0.0, %v1135
        %v1198 = vsel %vm1182, 0.0, %v1150
        %v1199 = vpack.c.bf16 %v781, %v780
        %v1200 = vpack.c.bf16 %v783, %v782
        %v1201 = vpack.c.bf16 %v785, %v784
        %v1202 = vpack.c.bf16 %v787, %v786
        %v1203 = vpack.c.bf16 %v789, %v788
        %v1204 = vpack.c.bf16 %v791, %v790
        %v1205 = vpack.c.bf16 %v793, %v792
        %v1206 = vpack.c.bf16 %v795, %v794
        %v1207 = vld [vmem:[#allocation8] sm:$0xf]
        %v1208 = vld [vmem:[#allocation8 + $0x4] sm:$0xf]
        %v1209 = vld [vmem:[#allocation8 + $0x8] sm:$0xf]
        %v1210 = vld [vmem:[#allocation8 + $0xc] sm:$0xf]
        %v1211 = vld [vmem:[#allocation8 + $0x10] sm:$0xf]
        %v1212 = vld [vmem:[#allocation8 + $0x14] sm:$0xf]
        %v1213 = vld [vmem:[#allocation8 + $0x18] sm:$0xf]
        %v1214 = vld [vmem:[#allocation8 + $0x1c] sm:$0xf]
        %v1215 = vld [vmem:[#allocation8 + $0x20] sm:$0xf]
        %v1216 = vld [vmem:[#allocation8 + $0x24] sm:$0xf]
        %v1217 = vld [vmem:[#allocation8 + $0x28] sm:$0xf]
        %v1218 = vld [vmem:[#allocation8 + $0x2c] sm:$0xf]
        %v1219 = vld [vmem:[#allocation8 + $0x30] sm:$0xf]
        %v1220 = vld [vmem:[#allocation8 + $0x34] sm:$0xf]
        %v1221 = vld [vmem:[#allocation8 + $0x38] sm:$0xf]
        %v1222 = vld [vmem:[#allocation8 + $0x3c] sm:$0xf]
        %v1223 = vpack.c.bf16 %v1087, %v1086
        %v1224 = vpack.c.bf16 %v1089, %v1088
        %v1225 = vpack.c.bf16 %v1091, %v1090
        %v1226 = vpack.c.bf16 %v1093, %v1092
        %v1227 = vpack.c.bf16 %v1095, %v1094
        %v1228 = vpack.c.bf16 %v1097, %v1096
        %v1229 = vpack.c.bf16 %v1099, %v1098
        %v1230 = vpack.c.bf16 %v1101, %v1100
        %v1231 = vld [vmem:[#allocation7] sm:$0xf]
        %v1232 = vld [vmem:[#allocation7 + $0x4] sm:$0xf]
        %v1233 = vld [vmem:[#allocation7 + $0x8] sm:$0xf]
        %v1234 = vld [vmem:[#allocation7 + $0xc] sm:$0xf]
        %v1235 = vld [vmem:[#allocation7 + $0x10] sm:$0xf]
        %v1236 = vld [vmem:[#allocation7 + $0x14] sm:$0xf]
        %v1237 = vld [vmem:[#allocation7 + $0x18] sm:$0xf]
        %v1238 = vld [vmem:[#allocation7 + $0x1c] sm:$0xf]
        %v1239 = vld [vmem:[#allocation7 + $0x20] sm:$0xf]
        %v1240 = vld [vmem:[#allocation7 + $0x24] sm:$0xf]
        %v1241 = vld [vmem:[#allocation7 + $0x28] sm:$0xf]
        %v1242 = vld [vmem:[#allocation7 + $0x2c] sm:$0xf]
        %v1243 = vld [vmem:[#allocation7 + $0x30] sm:$0xf]
        %v1244 = vld [vmem:[#allocation7 + $0x34] sm:$0xf]
        %v1245 = vld [vmem:[#allocation7 + $0x38] sm:$0xf]
        %v1246 = vld [vmem:[#allocation7 + $0x3c] sm:$0xf]
        %v1263 = vunpack.c.l.b16 %v1231
        %v1264 = vunpack.c.l.b16 %v1232
        %v1265 = vunpack.c.l.b16 %v1233
        %v1266 = vunpack.c.l.b16 %v1234
        %v1267 = vunpack.c.l.b16 %v1235
        %v1268 = vunpack.c.l.b16 %v1236
        %v1269 = vunpack.c.l.b16 %v1237
        %v1270 = vunpack.c.l.b16 %v1238
        %v1271 = vunpack.c.l.b16 %v1239
        %v1272 = vunpack.c.l.b16 %v1240
        %v1273 = vunpack.c.l.b16 %v1241
        %v1274 = vunpack.c.l.b16 %v1242
        %v1275 = vunpack.c.l.b16 %v1243
        %v1276 = vunpack.c.l.b16 %v1244
        %v1277 = vunpack.c.l.b16 %v1245
        %v1278 = vunpack.c.l.b16 %v1246
        %v1279 = vpack.c.b16 %v1264, %v1263
        %v1280 = vpack.c.b16 %v1266, %v1265
        %v1281 = vpack.c.b16 %v1268, %v1267
        %v1282 = vpack.c.b16 %v1270, %v1269
        %v1283 = vpack.c.b16 %v1272, %v1271
        %v1284 = vpack.c.b16 %v1274, %v1273
        %v1285 = vpack.c.b16 %v1276, %v1275
        %v1286 = vpack.c.b16 %v1278, %v1277
        %1295 = vmatprep.subr.bf16.mxu0 0
        %1296 = vmatpush1.bf16.msra.mxu0 %v1286
        %1297 = vmatprep.subr.bf16.mxu0 0
        %1298 = vmatpush1.bf16.msra.mxu0 %v1285
        %1299 = vmatprep.subr.bf16.mxu0 0
        %1300 = vmatpush1.bf16.msra.mxu0 %v1284
        %1301 = vmatprep.subr.bf16.mxu0 0
        %1302 = vmatpush1.bf16.msra.mxu0 %v1283
        %1303 = vmatprep.subr.bf16.mxu0 0
        %1304 = vmatpush1.bf16.msra.mxu0 %v1282
        %1305 = vmatprep.subr.bf16.mxu0 0
        %1306 = vmatpush1.bf16.msra.mxu0 %v1281
        %1307 = vmatprep.subr.bf16.mxu0 0
        %1308 = vmatpush1.bf16.msra.mxu0 %v1280
        %1309 = vmatprep.subr.bf16.mxu0 0
        %1310 = vmatpush1.bf16.msra.mxu0 %v1279
        %1311 = vmatprep.subr.bf16.mxu0 0
        %1312 = vmatpush2.bf16.msra.mxu0 0
        %1313 = vmatprep.subr.bf16.mxu0 0
        %1314 = vmatpush2.bf16.msra.mxu0 0
        %1315 = vmatprep.subr.bf16.mxu0 0
        %1316 = vmatpush2.bf16.msra.mxu0 0
        %1317 = vmatprep.subr.bf16.mxu0 0
        %1318 = vmatpush2.bf16.msra.mxu0 0
        %1319 = vmatprep.subr.bf16.mxu0 0
        %1320 = vmatpush2.bf16.msra.mxu0 0
        %1321 = vmatprep.subr.bf16.mxu0 0
        %1322 = vmatpush2.bf16.msra.mxu0 0
        %1323 = vmatprep.subr.bf16.mxu0 0
        %1324 = vmatpush2.bf16.msra.mxu0 0
        %1325 = vmatprep.subr.bf16.mxu0 0
        %1326 = vmatpush2.bf16.msra.mxu0 0
        %1327 = vmatprep.mubr.bf16.mxu0 0
        %1328 = vmatmul.mubr.bf16.gmra.mxu0 %v1223
        %v1329 = vpop.f32.mrf.mxu0
        %v1330 = vadd.f32 0.0, %v1329
        %v1331 = vpop.f32.mrf.mxu0
        %v1332 = vpop.f32.mrf.mxu0
        %v1333 = vadd.f32 0.0, %v1332
        %v1334 = vpop.f32.mrf.mxu0
        %1335 = vmatprep.mubr.bf16.mxu0 0
        %1336 = vmatmul.mubr.bf16.gmra.mxu0 %v1224
        %v1337 = vpop.f32.mrf.mxu0
        %v1338 = vadd.f32 0.0, %v1337
        %v1339 = vpop.f32.mrf.mxu0
        %v1340 = vpop.f32.mrf.mxu0
        %v1341 = vadd.f32 0.0, %v1340
        %v1342 = vpop.f32.mrf.mxu0
        %1343 = vmatprep.mubr.bf16.mxu0 0
        %1344 = vmatmul.mubr.bf16.gmra.mxu0 %v1225
        %v1345 = vpop.f32.mrf.mxu0
        %v1346 = vadd.f32 0.0, %v1345
        %v1347 = vpop.f32.mrf.mxu0
        %v1348 = vpop.f32.mrf.mxu0
        %v1349 = vadd.f32 0.0, %v1348
        %v1350 = vpop.f32.mrf.mxu0
        %1351 = vmatprep.mubr.bf16.mxu0 0
        %1352 = vmatmul.mubr.bf16.gmra.mxu0 %v1226
        %v1353 = vpop.f32.mrf.mxu0
        %v1354 = vadd.f32 0.0, %v1353
        %v1355 = vpop.f32.mrf.mxu0
        %v1356 = vpop.f32.mrf.mxu0
        %v1357 = vadd.f32 0.0, %v1356
        %v1358 = vpop.f32.mrf.mxu0
        %1359 = vmatprep.mubr.bf16.mxu0 0
        %1360 = vmatmul.mubr.bf16.gmra.mxu0 %v1227
        %v1361 = vpop.f32.mrf.mxu0
        %v1362 = vadd.f32 0.0, %v1361
        %v1363 = vpop.f32.mrf.mxu0
        %v1364 = vpop.f32.mrf.mxu0
        %v1365 = vadd.f32 0.0, %v1364
        %v1366 = vpop.f32.mrf.mxu0
        %1367 = vmatprep.mubr.bf16.mxu0 0
        %1368 = vmatmul.mubr.bf16.gmra.mxu0 %v1228
        %v1369 = vpop.f32.mrf.mxu0
        %v1370 = vadd.f32 0.0, %v1369
        %v1371 = vpop.f32.mrf.mxu0
        %v1372 = vpop.f32.mrf.mxu0
        %v1373 = vadd.f32 0.0, %v1372
        %v1374 = vpop.f32.mrf.mxu0
        %1375 = vmatprep.mubr.bf16.mxu0 0
        %1376 = vmatmul.mubr.bf16.gmra.mxu0 %v1229
        %v1377 = vpop.f32.mrf.mxu0
        %v1378 = vadd.f32 0.0, %v1377
        %v1379 = vpop.f32.mrf.mxu0
        %v1380 = vpop.f32.mrf.mxu0
        %v1381 = vadd.f32 0.0, %v1380
        %v1382 = vpop.f32.mrf.mxu0
        %1383 = vmatprep.mubr.bf16.mxu0 0
        %1384 = vmatmul.mubr.bf16.gmra.mxu0 %v1230
        %v1385 = vpop.f32.mrf.mxu0
        %v1386 = vadd.f32 0.0, %v1385
        %v1387 = vpop.f32.mrf.mxu0
        %v1388 = vpop.f32.mrf.mxu0
        %v1389 = vadd.f32 0.0, %v1388
        %v1390 = vpop.f32.mrf.mxu0
        %1391 = vdwg.mxu0
        %v1408 = vunpack.c.l.b16 %v1207
        %v1409 = vunpack.c.l.b16 %v1208
        %v1410 = vunpack.c.l.b16 %v1209
        %v1411 = vunpack.c.l.b16 %v1210
        %v1412 = vunpack.c.l.b16 %v1211
        %v1413 = vunpack.c.l.b16 %v1212
        %v1414 = vunpack.c.l.b16 %v1213
        %v1415 = vunpack.c.l.b16 %v1214
        %v1416 = vunpack.c.l.b16 %v1215
        %v1417 = vunpack.c.l.b16 %v1216
        %v1418 = vunpack.c.l.b16 %v1217
        %v1419 = vunpack.c.l.b16 %v1218
        %v1420 = vunpack.c.l.b16 %v1219
        %v1421 = vunpack.c.l.b16 %v1220
        %v1422 = vunpack.c.l.b16 %v1221
        %v1423 = vunpack.c.l.b16 %v1222
        %v1424 = vpack.c.b16 %v1409, %v1408
        %v1425 = vpack.c.b16 %v1411, %v1410
        %v1426 = vpack.c.b16 %v1413, %v1412
        %v1427 = vpack.c.b16 %v1415, %v1414
        %v1428 = vpack.c.b16 %v1417, %v1416
        %v1429 = vpack.c.b16 %v1419, %v1418
        %v1430 = vpack.c.b16 %v1421, %v1420
        %v1431 = vpack.c.b16 %v1423, %v1422
        %1440 = vmatprep.subr.bf16.mxu0 0
        %1441 = vmatpush1.bf16.msra.mxu0 %v1431
        %1442 = vmatprep.subr.bf16.mxu0 0
        %1443 = vmatpush1.bf16.msra.mxu0 %v1430
        %1444 = vmatprep.subr.bf16.mxu0 0
        %1445 = vmatpush1.bf16.msra.mxu0 %v1429
        %1446 = vmatprep.subr.bf16.mxu0 0
        %1447 = vmatpush1.bf16.msra.mxu0 %v1428
        %1448 = vmatprep.subr.bf16.mxu0 0
        %1449 = vmatpush1.bf16.msra.mxu0 %v1427
        %1450 = vmatprep.subr.bf16.mxu0 0
        %1451 = vmatpush1.bf16.msra.mxu0 %v1426
        %1452 = vmatprep.subr.bf16.mxu0 0
        %1453 = vmatpush1.bf16.msra.mxu0 %v1425
        %1454 = vmatprep.subr.bf16.mxu0 0
        %1455 = vmatpush1.bf16.msra.mxu0 %v1424
        %1456 = vmatprep.subr.bf16.mxu0 0
        %1457 = vmatpush2.bf16.msra.mxu0 0
        %1458 = vmatprep.subr.bf16.mxu0 0
        %1459 = vmatpush2.bf16.msra.mxu0 0
        %1460 = vmatprep.subr.bf16.mxu0 0
        %1461 = vmatpush2.bf16.msra.mxu0 0
        %1462 = vmatprep.subr.bf16.mxu0 0
        %1463 = vmatpush2.bf16.msra.mxu0 0
        %1464 = vmatprep.subr.bf16.mxu0 0
        %1465 = vmatpush2.bf16.msra.mxu0 0
        %1466 = vmatprep.subr.bf16.mxu0 0
        %1467 = vmatpush2.bf16.msra.mxu0 0
        %1468 = vmatprep.subr.bf16.mxu0 0
        %1469 = vmatpush2.bf16.msra.mxu0 0
        %1470 = vmatprep.subr.bf16.mxu0 0
        %1471 = vmatpush2.bf16.msra.mxu0 0
        %1472 = vmatprep.mubr.bf16.mxu0 0
        %1473 = vmatmul.mubr.bf16.gmra.mxu0 %v1199
        %v1474 = vpop.f32.mrf.mxu0
        %v1475 = vadd.f32 %v1330, %v1474
        %v1476 = vpop.f32.mrf.mxu0
        %v1477 = vpop.f32.mrf.mxu0
        %v1478 = vadd.f32 %v1333, %v1477
        %v1479 = vpop.f32.mrf.mxu0
        %1480 = vmatprep.mubr.bf16.mxu0 0
        %1481 = vmatmul.mubr.bf16.gmra.mxu0 %v1200
        %v1482 = vpop.f32.mrf.mxu0
        %v1483 = vadd.f32 %v1338, %v1482
        %v1484 = vpop.f32.mrf.mxu0
        %v1485 = vpop.f32.mrf.mxu0
        %v1486 = vadd.f32 %v1341, %v1485
        %v1487 = vpop.f32.mrf.mxu0
        %1488 = vmatprep.mubr.bf16.mxu0 0
        %1489 = vmatmul.mubr.bf16.gmra.mxu0 %v1201
        %v1490 = vpop.f32.mrf.mxu0
        %v1491 = vadd.f32 %v1346, %v1490
        %v1492 = vpop.f32.mrf.mxu0
        %v1493 = vpop.f32.mrf.mxu0
        %v1494 = vadd.f32 %v1349, %v1493
        %v1495 = vpop.f32.mrf.mxu0
        %1496 = vmatprep.mubr.bf16.mxu0 0
        %1497 = vmatmul.mubr.bf16.gmra.mxu0 %v1202
        %v1498 = vpop.f32.mrf.mxu0
        %v1499 = vadd.f32 %v1354, %v1498
        %v1500 = vpop.f32.mrf.mxu0
        %v1501 = vpop.f32.mrf.mxu0
        %v1502 = vadd.f32 %v1357, %v1501
        %v1503 = vpop.f32.mrf.mxu0
        %1504 = vmatprep.mubr.bf16.mxu0 0
        %1505 = vmatmul.mubr.bf16.gmra.mxu0 %v1203
        %v1506 = vpop.f32.mrf.mxu0
        %v1507 = vadd.f32 %v1362, %v1506
        %v1508 = vpop.f32.mrf.mxu0
        %v1509 = vpop.f32.mrf.mxu0
        %v1510 = vadd.f32 %v1365, %v1509
        %v1511 = vpop.f32.mrf.mxu0
        %1512 = vmatprep.mubr.bf16.mxu0 0
        %1513 = vmatmul.mubr.bf16.gmra.mxu0 %v1204
        %v1514 = vpop.f32.mrf.mxu0
        %v1515 = vadd.f32 %v1370, %v1514
        %v1516 = vpop.f32.mrf.mxu0
        %v1517 = vpop.f32.mrf.mxu0
        %v1518 = vadd.f32 %v1373, %v1517
        %v1519 = vpop.f32.mrf.mxu0
        %1520 = vmatprep.mubr.bf16.mxu0 0
        %1521 = vmatmul.mubr.bf16.gmra.mxu0 %v1205
        %v1522 = vpop.f32.mrf.mxu0
        %v1523 = vadd.f32 %v1378, %v1522
        %v1524 = vpop.f32.mrf.mxu0
        %v1525 = vpop.f32.mrf.mxu0
        %v1526 = vadd.f32 %v1381, %v1525
        %v1527 = vpop.f32.mrf.mxu0
        %1528 = vmatprep.mubr.bf16.mxu0 0
        %1529 = vmatmul.mubr.bf16.gmra.mxu0 %v1206
        %v1530 = vpop.f32.mrf.mxu0
        %v1531 = vadd.f32 %v1386, %v1530
        %v1532 = vpop.f32.mrf.mxu0
        %v1533 = vpop.f32.mrf.mxu0
        %v1534 = vadd.f32 %v1389, %v1533
        %v1535 = vpop.f32.mrf.mxu0
        %1536 = vdwg.mxu0
        %v1537 = vpack.c.bf16 %v1184, %v1183
        %v1538 = vpack.c.bf16 %v1186, %v1185
        %v1539 = vpack.c.bf16 %v1188, %v1187
        %v1540 = vpack.c.bf16 %v1190, %v1189
        %v1541 = vpack.c.bf16 %v1192, %v1191
        %v1542 = vpack.c.bf16 %v1194, %v1193
        %v1543 = vpack.c.bf16 %v1196, %v1195
        %v1544 = vpack.c.bf16 %v1198, %v1197
        %v1545 = vld [vmem:[#allocation10] sm:$0xf]
        %v1546 = vld [vmem:[#allocation10 + $0x4] sm:$0xf]
        %v1547 = vld [vmem:[#allocation10 + $0x8] sm:$0xf]
        %v1548 = vld [vmem:[#allocation10 + $0xc] sm:$0xf]
        %v1549 = vld [vmem:[#allocation10 + $0x10] sm:$0xf]
        %v1550 = vld [vmem:[#allocation10 + $0x14] sm:$0xf]
        %v1551 = vld [vmem:[#allocation10 + $0x18] sm:$0xf]
        %v1552 = vld [vmem:[#allocation10 + $0x1c] sm:$0xf]
        %v1553 = vld [vmem:[#allocation10 + $0x20] sm:$0xf]
        %v1554 = vld [vmem:[#allocation10 + $0x24] sm:$0xf]
        %v1555 = vld [vmem:[#allocation10 + $0x28] sm:$0xf]
        %v1556 = vld [vmem:[#allocation10 + $0x2c] sm:$0xf]
        %v1557 = vld [vmem:[#allocation10 + $0x30] sm:$0xf]
        %v1558 = vld [vmem:[#allocation10 + $0x34] sm:$0xf]
        %v1559 = vld [vmem:[#allocation10 + $0x38] sm:$0xf]
        %v1560 = vld [vmem:[#allocation10 + $0x3c] sm:$0xf]
        %v1577 = vunpack.c.l.b16 %v1545
        %v1578 = vunpack.c.l.b16 %v1546
        %v1579 = vunpack.c.l.b16 %v1547
        %v1580 = vunpack.c.l.b16 %v1548
        %v1581 = vunpack.c.l.b16 %v1549
        %v1582 = vunpack.c.l.b16 %v1550
        %v1583 = vunpack.c.l.b16 %v1551
        %v1584 = vunpack.c.l.b16 %v1552
        %v1585 = vunpack.c.l.b16 %v1553
        %v1586 = vunpack.c.l.b16 %v1554
        %v1587 = vunpack.c.l.b16 %v1555
        %v1588 = vunpack.c.l.b16 %v1556
        %v1589 = vunpack.c.l.b16 %v1557
        %v1590 = vunpack.c.l.b16 %v1558
        %v1591 = vunpack.c.l.b16 %v1559
        %v1592 = vunpack.c.l.b16 %v1560
        %v1593 = vpack.c.b16 %v1578, %v1577
        %v1594 = vpack.c.b16 %v1580, %v1579
        %v1595 = vpack.c.b16 %v1582, %v1581
        %v1596 = vpack.c.b16 %v1584, %v1583
        %v1597 = vpack.c.b16 %v1586, %v1585
        %v1598 = vpack.c.b16 %v1588, %v1587
        %v1599 = vpack.c.b16 %v1590, %v1589
        %v1600 = vpack.c.b16 %v1592, %v1591
        %1609 = vmatprep.subr.bf16.mxu0 0
        %1610 = vmatpush1.bf16.msra.mxu0 %v1600
        %1611 = vmatprep.subr.bf16.mxu0 0
        %1612 = vmatpush1.bf16.msra.mxu0 %v1599
        %1613 = vmatprep.subr.bf16.mxu0 0
        %1614 = vmatpush1.bf16.msra.mxu0 %v1598
        %1615 = vmatprep.subr.bf16.mxu0 0
        %1616 = vmatpush1.bf16.msra.mxu0 %v1597
        %1617 = vmatprep.subr.bf16.mxu0 0
        %1618 = vmatpush1.bf16.msra.mxu0 %v1596
        %1619 = vmatprep.subr.bf16.mxu0 0
        %1620 = vmatpush1.bf16.msra.mxu0 %v1595
        %1621 = vmatprep.subr.bf16.mxu0 0
        %1622 = vmatpush1.bf16.msra.mxu0 %v1594
        %1623 = vmatprep.subr.bf16.mxu0 0
        %1624 = vmatpush1.bf16.msra.mxu0 %v1593
        %1625 = vmatprep.subr.bf16.mxu0 0
        %1626 = vmatpush2.bf16.msra.mxu0 0
        %1627 = vmatprep.subr.bf16.mxu0 0
        %1628 = vmatpush2.bf16.msra.mxu0 0
        %1629 = vmatprep.subr.bf16.mxu0 0
        %1630 = vmatpush2.bf16.msra.mxu0 0
        %1631 = vmatprep.subr.bf16.mxu0 0
        %1632 = vmatpush2.bf16.msra.mxu0 0
        %1633 = vmatprep.subr.bf16.mxu0 0
        %1634 = vmatpush2.bf16.msra.mxu0 0
        %1635 = vmatprep.subr.bf16.mxu0 0
        %1636 = vmatpush2.bf16.msra.mxu0 0
        %1637 = vmatprep.subr.bf16.mxu0 0
        %1638 = vmatpush2.bf16.msra.mxu0 0
        %1639 = vmatprep.subr.bf16.mxu0 0
        %1640 = vmatpush2.bf16.msra.mxu0 0
        %1641 = vmatprep.mubr.bf16.mxu0 0
        %1642 = vmatmul.mubr.bf16.gmra.mxu0 %v1537
        %v1643 = vpop.f32.mrf.mxu0
        %v1644 = vadd.f32 0.0, %v1643
        %v1645 = vpop.f32.mrf.mxu0
        %v1646 = vpop.f32.mrf.mxu0
        %v1647 = vadd.f32 0.0, %v1646
        %v1648 = vpop.f32.mrf.mxu0
        %1649 = vmatprep.mubr.bf16.mxu0 0
        %1650 = vmatmul.mubr.bf16.gmra.mxu0 %v1538
        %v1651 = vpop.f32.mrf.mxu0
        %v1652 = vadd.f32 0.0, %v1651
        %v1653 = vpop.f32.mrf.mxu0
        %v1654 = vpop.f32.mrf.mxu0
        %v1655 = vadd.f32 0.0, %v1654
        %v1656 = vpop.f32.mrf.mxu0
        %1657 = vmatprep.mubr.bf16.mxu0 0
        %1658 = vmatmul.mubr.bf16.gmra.mxu0 %v1539
        %v1659 = vpop.f32.mrf.mxu0
        %v1660 = vadd.f32 0.0, %v1659
        %v1661 = vpop.f32.mrf.mxu0
        %v1662 = vpop.f32.mrf.mxu0
        %v1663 = vadd.f32 0.0, %v1662
        %v1664 = vpop.f32.mrf.mxu0
        %1665 = vmatprep.mubr.bf16.mxu0 0
        %1666 = vmatmul.mubr.bf16.gmra.mxu0 %v1540
        %v1667 = vpop.f32.mrf.mxu0
        %v1668 = vadd.f32 0.0, %v1667
        %v1669 = vpop.f32.mrf.mxu0
        %v1670 = vpop.f32.mrf.mxu0
        %v1671 = vadd.f32 0.0, %v1670
        %v1672 = vpop.f32.mrf.mxu0
        %1673 = vmatprep.mubr.bf16.mxu0 0
        %1674 = vmatmul.mubr.bf16.gmra.mxu0 %v1541
        %v1675 = vpop.f32.mrf.mxu0
        %v1676 = vadd.f32 0.0, %v1675
        %v1677 = vpop.f32.mrf.mxu0
        %v1678 = vpop.f32.mrf.mxu0
        %v1679 = vadd.f32 0.0, %v1678
        %v1680 = vpop.f32.mrf.mxu0
        %1681 = vmatprep.mubr.bf16.mxu0 0
        %1682 = vmatmul.mubr.bf16.gmra.mxu0 %v1542
        %v1683 = vpop.f32.mrf.mxu0
        %v1684 = vadd.f32 0.0, %v1683
        %v1685 = vpop.f32.mrf.mxu0
        %v1686 = vpop.f32.mrf.mxu0
        %v1687 = vadd.f32 0.0, %v1686
        %v1688 = vpop.f32.mrf.mxu0
        %1689 = vmatprep.mubr.bf16.mxu0 0
        %1690 = vmatmul.mubr.bf16.gmra.mxu0 %v1543
        %v1691 = vpop.f32.mrf.mxu0
        %v1692 = vadd.f32 0.0, %v1691
        %v1693 = vpop.f32.mrf.mxu0
        %v1694 = vpop.f32.mrf.mxu0
        %v1695 = vadd.f32 0.0, %v1694
        %v1696 = vpop.f32.mrf.mxu0
        %1697 = vmatprep.mubr.bf16.mxu0 0
        %1698 = vmatmul.mubr.bf16.gmra.mxu0 %v1544
        %v1699 = vpop.f32.mrf.mxu0
        %v1700 = vadd.f32 0.0, %v1699
        %v1701 = vpop.f32.mrf.mxu0
        %v1702 = vpop.f32.mrf.mxu0
        %v1703 = vadd.f32 0.0, %v1702
        %v1704 = vpop.f32.mrf.mxu0
        %1705 = vdwg.mxu0
        %v1706 = vadd.f32 %v1475, %v1644
        %v1707 = vadd.f32 %v1478, %v1647
        %v1708 = vadd.f32 %v1483, %v1652
        %v1709 = vadd.f32 %v1486, %v1655
        %v1710 = vadd.f32 %v1491, %v1660
        %v1711 = vadd.f32 %v1494, %v1663
        %v1712 = vadd.f32 %v1499, %v1668
        %v1713 = vadd.f32 %v1502, %v1671
        %v1714 = vadd.f32 %v1507, %v1676
        %v1715 = vadd.f32 %v1510, %v1679
        %v1716 = vadd.f32 %v1515, %v1684
        %v1717 = vadd.f32 %v1518, %v1687
        %v1718 = vadd.f32 %v1523, %v1692
        %v1719 = vadd.f32 %v1526, %v1695
        %v1720 = vadd.f32 %v1531, %v1700
        %v1721 = vadd.f32 %v1534, %v1703
        %v1722 = vld [vmem:[%s6] sm:$0x1]
        %v1724 = vlaneseq
        %v1725 = vshrl.u32 %v1724, 7
        %v1726 = vsub.s32 0, %v1725
        %v1727 = vrot.slane %v1722, %v1726
        %v1729 = vadd.f32 %v1706, %v1727
        %v1730 = vadd.f32 %v1707, %v1727
        %v1731 = vadd.f32 %v1708, %v1727
        %v1732 = vadd.f32 %v1709, %v1727
        %v1733 = vadd.f32 %v1710, %v1727
        %v1734 = vadd.f32 %v1711, %v1727
        %v1735 = vadd.f32 %v1712, %v1727
        %v1736 = vadd.f32 %v1713, %v1727
        %v1737 = vadd.f32 %v1714, %v1727
        %v1738 = vadd.f32 %v1715, %v1727
        %v1739 = vadd.f32 %v1716, %v1727
        %v1740 = vadd.f32 %v1717, %v1727
        %v1741 = vadd.f32 %v1718, %v1727
        %v1742 = vadd.f32 %v1719, %v1727
        %v1743 = vadd.f32 %v1720, %v1727
        %v1744 = vadd.f32 %v1721, %v1727
        %v1745 = vsub.f32 0.0, %v1729
        %v1746 = vsub.f32 0.0, %v1730
        %v1747 = vsub.f32 0.0, %v1731
        %v1748 = vsub.f32 0.0, %v1732
        %v1749 = vsub.f32 0.0, %v1733
        %v1750 = vsub.f32 0.0, %v1734
        %v1751 = vsub.f32 0.0, %v1735
        %v1752 = vsub.f32 0.0, %v1736
        %v1753 = vsub.f32 0.0, %v1737
        %v1754 = vsub.f32 0.0, %v1738
        %v1755 = vsub.f32 0.0, %v1739
        %v1756 = vsub.f32 0.0, %v1740
        %v1757 = vsub.f32 0.0, %v1741
        %v1758 = vsub.f32 0.0, %v1742
        %v1759 = vsub.f32 0.0, %v1743
        %v1760 = vsub.f32 0.0, %v1744
        %v1761 = vmul.f32 %v1745, 1.442695
        %v1762 = vpow.pop %v1761
        %v1763 = vmul.f32 %v1746, 1.442695
        %v1764 = vpow.pop %v1763
        %v1765 = vmul.f32 %v1747, 1.442695
        %v1766 = vpow.pop %v1765
        %v1767 = vmul.f32 %v1748, 1.442695
        %v1768 = vpow.pop %v1767
        %v1769 = vmul.f32 %v1749, 1.442695
        %v1770 = vpow.pop %v1769
        %v1771 = vmul.f32 %v1750, 1.442695
        %v1772 = vpow.pop %v1771
        %v1773 = vmul.f32 %v1751, 1.442695
        %v1774 = vpow.pop %v1773
        %v1775 = vmul.f32 %v1752, 1.442695
        %v1776 = vpow.pop %v1775
        %v1777 = vmul.f32 %v1753, 1.442695
        %v1778 = vpow.pop %v1777
        %v1779 = vmul.f32 %v1754, 1.442695
        %v1780 = vpow.pop %v1779
        %v1781 = vmul.f32 %v1755, 1.442695
        %v1782 = vpow.pop %v1781
        %v1783 = vmul.f32 %v1756, 1.442695
        %v1784 = vpow.pop %v1783
        %v1785 = vmul.f32 %v1757, 1.442695
        %v1786 = vpow.pop %v1785
        %v1787 = vmul.f32 %v1758, 1.442695
        %v1788 = vpow.pop %v1787
        %v1789 = vmul.f32 %v1759, 1.442695
        %v1790 = vpow.pop %v1789
        %v1791 = vmul.f32 %v1760, 1.442695
        %v1792 = vpow.pop %v1791
        %v1793 = vadd.f32 %v1762, 1.0
        %v1794 = vadd.f32 %v1764, 1.0
        %v1795 = vadd.f32 %v1766, 1.0
        %v1796 = vadd.f32 %v1768, 1.0
        %v1797 = vadd.f32 %v1770, 1.0
        %v1798 = vadd.f32 %v1772, 1.0
        %v1799 = vadd.f32 %v1774, 1.0
        %v1800 = vadd.f32 %v1776, 1.0
        %v1801 = vadd.f32 %v1778, 1.0
        %v1802 = vadd.f32 %v1780, 1.0
        %v1803 = vadd.f32 %v1782, 1.0
        %v1804 = vadd.f32 %v1784, 1.0
        %v1805 = vadd.f32 %v1786, 1.0
        %v1806 = vadd.f32 %v1788, 1.0
        %v1807 = vadd.f32 %v1790, 1.0
        %v1808 = vadd.f32 %v1792, 1.0
        %v1809 = vrcp.pop %v1793
        %v1810 = vrcp.pop %v1794
        %v1811 = vrcp.pop %v1795
        %v1812 = vrcp.pop %v1796
        %v1813 = vrcp.pop %v1797
        %v1814 = vrcp.pop %v1798
        %v1815 = vrcp.pop %v1799
        %v1816 = vrcp.pop %v1800
        %v1817 = vrcp.pop %v1801
        %v1818 = vrcp.pop %v1802
        %v1819 = vrcp.pop %v1803
        %v1820 = vrcp.pop %v1804
        %v1821 = vrcp.pop %v1805
        %v1822 = vrcp.pop %v1806
        %v1823 = vrcp.pop %v1807
        %v1824 = vrcp.pop %v1808
        %v1825 = vmul.f32 %v1729, %v1809
        %v1826 = vmul.f32 %v1730, %v1810
        %v1827 = vmul.f32 %v1731, %v1811
        %v1828 = vmul.f32 %v1732, %v1812
        %v1829 = vmul.f32 %v1733, %v1813
        %v1830 = vmul.f32 %v1734, %v1814
        %v1831 = vmul.f32 %v1735, %v1815
        %v1832 = vmul.f32 %v1736, %v1816
        %v1833 = vmul.f32 %v1737, %v1817
        %v1834 = vmul.f32 %v1738, %v1818
        %v1835 = vmul.f32 %v1739, %v1819
        %v1836 = vmul.f32 %v1740, %v1820
        %v1837 = vmul.f32 %v1741, %v1821
        %v1838 = vmul.f32 %v1742, %v1822
        %v1839 = vmul.f32 %v1743, %v1823
        %v1840 = vmul.f32 %v1744, %v1824
        %v1841 = vpack.c.bf16 %v1826, %v1825
        %v1842 = vpack.c.bf16 %v1828, %v1827
        %v1843 = vpack.c.bf16 %v1830, %v1829
        %v1844 = vpack.c.bf16 %v1832, %v1831
        %v1845 = vpack.c.bf16 %v1834, %v1833
        %v1846 = vpack.c.bf16 %v1836, %v1835
        %v1847 = vpack.c.bf16 %v1838, %v1837
        %v1848 = vpack.c.bf16 %v1840, %v1839
        %v1849 = vld [vmem:[#allocation11] sm:$0xf]
        %v1850 = vld [vmem:[#allocation11 + $0x4] sm:$0xf]
        %v1851 = vld [vmem:[#allocation11 + $0x8] sm:$0xf]
        %v1852 = vld [vmem:[#allocation11 + $0xc] sm:$0xf]
        %v1853 = vld [vmem:[#allocation11 + $0x10] sm:$0xf]
        %v1854 = vld [vmem:[#allocation11 + $0x14] sm:$0xf]
        %v1855 = vld [vmem:[#allocation11 + $0x18] sm:$0xf]
        %v1856 = vld [vmem:[#allocation11 + $0x1c] sm:$0xf]
        %v1857 = vld [vmem:[#allocation11 + $0x20] sm:$0xf]
        %v1858 = vld [vmem:[#allocation11 + $0x24] sm:$0xf]
        %v1859 = vld [vmem:[#allocation11 + $0x28] sm:$0xf]
        %v1860 = vld [vmem:[#allocation11 + $0x2c] sm:$0xf]
        %v1861 = vld [vmem:[#allocation11 + $0x30] sm:$0xf]
        %v1862 = vld [vmem:[#allocation11 + $0x34] sm:$0xf]
        %v1863 = vld [vmem:[#allocation11 + $0x38] sm:$0xf]
        %v1864 = vld [vmem:[#allocation11 + $0x3c] sm:$0xf]
        %v1865 = vld [vmem:[#allocation13] sm:$0xf]
        %v1866 = vld [vmem:[#allocation13 + $0x4] sm:$0xf]
        %v1867 = vld [vmem:[#allocation13 + $0x8] sm:$0xf]
        %v1868 = vld [vmem:[#allocation13 + $0xc] sm:$0xf]
        %v1869 = vld [vmem:[#allocation13 + $0x10] sm:$0xf]
        %v1870 = vld [vmem:[#allocation13 + $0x14] sm:$0xf]
        %v1871 = vld [vmem:[#allocation13 + $0x18] sm:$0xf]
        %v1872 = vld [vmem:[#allocation13 + $0x1c] sm:$0xf]
        %v1873 = vld [vmem:[#allocation13 + $0x20] sm:$0xf]
        %v1874 = vld [vmem:[#allocation13 + $0x24] sm:$0xf]
        %v1875 = vld [vmem:[#allocation13 + $0x28] sm:$0xf]
        %v1876 = vld [vmem:[#allocation13 + $0x2c] sm:$0xf]
        %v1877 = vld [vmem:[#allocation13 + $0x30] sm:$0xf]
        %v1878 = vld [vmem:[#allocation13 + $0x34] sm:$0xf]
        %v1879 = vld [vmem:[#allocation13 + $0x38] sm:$0xf]
        %v1880 = vld [vmem:[#allocation13 + $0x3c] sm:$0xf]
        %v1897 = vunpack.c.l.b16 %v1865
        %v1898 = vunpack.c.l.b16 %v1866
        %v1899 = vunpack.c.l.b16 %v1867
        %v1900 = vunpack.c.l.b16 %v1868
        %v1901 = vunpack.c.l.b16 %v1869
        %v1902 = vunpack.c.l.b16 %v1870
        %v1903 = vunpack.c.l.b16 %v1871
        %v1904 = vunpack.c.l.b16 %v1872
        %v1905 = vunpack.c.l.b16 %v1873
        %v1906 = vunpack.c.l.b16 %v1874
        %v1907 = vunpack.c.l.b16 %v1875
        %v1908 = vunpack.c.l.b16 %v1876
        %v1909 = vunpack.c.l.b16 %v1877
        %v1910 = vunpack.c.l.b16 %v1878
        %v1911 = vunpack.c.l.b16 %v1879
        %v1912 = vunpack.c.l.b16 %v1880
        %v1913 = vpack.c.b16 %v1898, %v1897
        %v1914 = vpack.c.b16 %v1900, %v1899
        %v1915 = vpack.c.b16 %v1902, %v1901
        %v1916 = vpack.c.b16 %v1904, %v1903
        %v1917 = vpack.c.b16 %v1906, %v1905
        %v1918 = vpack.c.b16 %v1908, %v1907
        %v1919 = vpack.c.b16 %v1910, %v1909
        %v1920 = vpack.c.b16 %v1912, %v1911
        %1929 = vmatprep.subr.bf16.mxu0 0
        %1930 = vmatpush1.bf16.msra.mxu0 %v1920
        %1931 = vmatprep.subr.bf16.mxu0 0
        %1932 = vmatpush1.bf16.msra.mxu0 %v1919
        %1933 = vmatprep.subr.bf16.mxu0 0
        %1934 = vmatpush1.bf16.msra.mxu0 %v1918
        %1935 = vmatprep.subr.bf16.mxu0 0
        %1936 = vmatpush1.bf16.msra.mxu0 %v1917
        %1937 = vmatprep.subr.bf16.mxu0 0
        %1938 = vmatpush1.bf16.msra.mxu0 %v1916
        %1939 = vmatprep.subr.bf16.mxu0 0
        %1940 = vmatpush1.bf16.msra.mxu0 %v1915
        %1941 = vmatprep.subr.bf16.mxu0 0
        %1942 = vmatpush1.bf16.msra.mxu0 %v1914
        %1943 = vmatprep.subr.bf16.mxu0 0
        %1944 = vmatpush1.bf16.msra.mxu0 %v1913
        %1945 = vmatprep.subr.bf16.mxu0 0
        %1946 = vmatpush2.bf16.msra.mxu0 0
        %1947 = vmatprep.subr.bf16.mxu0 0
        %1948 = vmatpush2.bf16.msra.mxu0 0
        %1949 = vmatprep.subr.bf16.mxu0 0
        %1950 = vmatpush2.bf16.msra.mxu0 0
        %1951 = vmatprep.subr.bf16.mxu0 0
        %1952 = vmatpush2.bf16.msra.mxu0 0
        %1953 = vmatprep.subr.bf16.mxu0 0
        %1954 = vmatpush2.bf16.msra.mxu0 0
        %1955 = vmatprep.subr.bf16.mxu0 0
        %1956 = vmatpush2.bf16.msra.mxu0 0
        %1957 = vmatprep.subr.bf16.mxu0 0
        %1958 = vmatpush2.bf16.msra.mxu0 0
        %1959 = vmatprep.subr.bf16.mxu0 0
        %1960 = vmatpush2.bf16.msra.mxu0 0
        %1961 = vmatprep.mubr.bf16.mxu0 0
        %1962 = vmatmul.mubr.bf16.gmra.mxu0 %v539
        %v1963 = vpop.f32.mrf.mxu0
        %v1964 = vadd.f32 0.0, %v1963
        %v1965 = vpop.f32.mrf.mxu0
        %v1966 = vpop.f32.mrf.mxu0
        %v1967 = vadd.f32 0.0, %v1966
        %v1968 = vpop.f32.mrf.mxu0
        %1969 = vmatprep.mubr.bf16.mxu0 0
        %1970 = vmatmul.mubr.bf16.gmra.mxu0 %v540
        %v1971 = vpop.f32.mrf.mxu0
        %v1972 = vadd.f32 0.0, %v1971
        %v1973 = vpop.f32.mrf.mxu0
        %v1974 = vpop.f32.mrf.mxu0
        %v1975 = vadd.f32 0.0, %v1974
        %v1976 = vpop.f32.mrf.mxu0
        %1977 = vmatprep.mubr.bf16.mxu0 0
        %1978 = vmatmul.mubr.bf16.gmra.mxu0 %v541
        %v1979 = vpop.f32.mrf.mxu0
        %v1980 = vadd.f32 0.0, %v1979
        %v1981 = vpop.f32.mrf.mxu0
        %v1982 = vpop.f32.mrf.mxu0
        %v1983 = vadd.f32 0.0, %v1982
        %v1984 = vpop.f32.mrf.mxu0
        %1985 = vmatprep.mubr.bf16.mxu0 0
        %1986 = vmatmul.mubr.bf16.gmra.mxu0 %v542
        %v1987 = vpop.f32.mrf.mxu0
        %v1988 = vadd.f32 0.0, %v1987
        %v1989 = vpop.f32.mrf.mxu0
        %v1990 = vpop.f32.mrf.mxu0
        %v1991 = vadd.f32 0.0, %v1990
        %v1992 = vpop.f32.mrf.mxu0
        %1993 = vmatprep.mubr.bf16.mxu0 0
        %1994 = vmatmul.mubr.bf16.gmra.mxu0 %v543
        %v1995 = vpop.f32.mrf.mxu0
        %v1996 = vadd.f32 0.0, %v1995
        %v1997 = vpop.f32.mrf.mxu0
        %v1998 = vpop.f32.mrf.mxu0
        %v1999 = vadd.f32 0.0, %v1998
        %v2000 = vpop.f32.mrf.mxu0
        %2001 = vmatprep.mubr.bf16.mxu0 0
        %2002 = vmatmul.mubr.bf16.gmra.mxu0 %v544
        %v2003 = vpop.f32.mrf.mxu0
        %v2004 = vadd.f32 0.0, %v2003
        %v2005 = vpop.f32.mrf.mxu0
        %v2006 = vpop.f32.mrf.mxu0
        %v2007 = vadd.f32 0.0, %v2006
        %v2008 = vpop.f32.mrf.mxu0
        %2009 = vmatprep.mubr.bf16.mxu0 0
        %2010 = vmatmul.mubr.bf16.gmra.mxu0 %v545
        %v2011 = vpop.f32.mrf.mxu0
        %v2012 = vadd.f32 0.0, %v2011
        %v2013 = vpop.f32.mrf.mxu0
        %v2014 = vpop.f32.mrf.mxu0
        %v2015 = vadd.f32 0.0, %v2014
        %v2016 = vpop.f32.mrf.mxu0
        %2017 = vmatprep.mubr.bf16.mxu0 0
        %2018 = vmatmul.mubr.bf16.gmra.mxu0 %v546
        %v2019 = vpop.f32.mrf.mxu0
        %v2020 = vadd.f32 0.0, %v2019
        %v2021 = vpop.f32.mrf.mxu0
        %v2022 = vpop.f32.mrf.mxu0
        %v2023 = vadd.f32 0.0, %v2022
        %v2024 = vpop.f32.mrf.mxu0
        %2025 = vdwg.mxu0
        %v2042 = vunpack.c.l.b16 %v1849
        %v2043 = vunpack.c.l.b16 %v1850
        %v2044 = vunpack.c.l.b16 %v1851
        %v2045 = vunpack.c.l.b16 %v1852
        %v2046 = vunpack.c.l.b16 %v1853
        %v2047 = vunpack.c.l.b16 %v1854
        %v2048 = vunpack.c.l.b16 %v1855
        %v2049 = vunpack.c.l.b16 %v1856
        %v2050 = vunpack.c.l.b16 %v1857
        %v2051 = vunpack.c.l.b16 %v1858
        %v2052 = vunpack.c.l.b16 %v1859
        %v2053 = vunpack.c.l.b16 %v1860
        %v2054 = vunpack.c.l.b16 %v1861
        %v2055 = vunpack.c.l.b16 %v1862
        %v2056 = vunpack.c.l.b16 %v1863
        %v2057 = vunpack.c.l.b16 %v1864
        %v2058 = vpack.c.b16 %v2043, %v2042
        %v2059 = vpack.c.b16 %v2045, %v2044
        %v2060 = vpack.c.b16 %v2047, %v2046
        %v2061 = vpack.c.b16 %v2049, %v2048
        %v2062 = vpack.c.b16 %v2051, %v2050
        %v2063 = vpack.c.b16 %v2053, %v2052
        %v2064 = vpack.c.b16 %v2055, %v2054
        %v2065 = vpack.c.b16 %v2057, %v2056
        %2074 = vmatprep.subr.bf16.mxu0 0
        %2075 = vmatpush1.bf16.msra.mxu0 %v2065
        %2076 = vmatprep.subr.bf16.mxu0 0
        %2077 = vmatpush1.bf16.msra.mxu0 %v2064
        %2078 = vmatprep.subr.bf16.mxu0 0
        %2079 = vmatpush1.bf16.msra.mxu0 %v2063
        %2080 = vmatprep.subr.bf16.mxu0 0
        %2081 = vmatpush1.bf16.msra.mxu0 %v2062
        %2082 = vmatprep.subr.bf16.mxu0 0
        %2083 = vmatpush1.bf16.msra.mxu0 %v2061
        %2084 = vmatprep.subr.bf16.mxu0 0
        %2085 = vmatpush1.bf16.msra.mxu0 %v2060
        %2086 = vmatprep.subr.bf16.mxu0 0
        %2087 = vmatpush1.bf16.msra.mxu0 %v2059
        %2088 = vmatprep.subr.bf16.mxu0 0
        %2089 = vmatpush1.bf16.msra.mxu0 %v2058
        %2090 = vmatprep.subr.bf16.mxu0 0
        %2091 = vmatpush2.bf16.msra.mxu0 0
        %2092 = vmatprep.subr.bf16.mxu0 0
        %2093 = vmatpush2.bf16.msra.mxu0 0
        %2094 = vmatprep.subr.bf16.mxu0 0
        %2095 = vmatpush2.bf16.msra.mxu0 0
        %2096 = vmatprep.subr.bf16.mxu0 0
        %2097 = vmatpush2.bf16.msra.mxu0 0
        %2098 = vmatprep.subr.bf16.mxu0 0
        %2099 = vmatpush2.bf16.msra.mxu0 0
        %2100 = vmatprep.subr.bf16.mxu0 0
        %2101 = vmatpush2.bf16.msra.mxu0 0
        %2102 = vmatprep.subr.bf16.mxu0 0
        %2103 = vmatpush2.bf16.msra.mxu0 0
        %2104 = vmatprep.subr.bf16.mxu0 0
        %2105 = vmatpush2.bf16.msra.mxu0 0
        %2106 = vmatprep.mubr.bf16.mxu0 0
        %2107 = vmatmul.mubr.bf16.gmra.mxu0 %v1841
        %v2108 = vpop.f32.mrf.mxu0
        %v2109 = vadd.f32 %v1964, %v2108
        %v2110 = vpop.f32.mrf.mxu0
        %v2111 = vpop.f32.mrf.mxu0
        %v2112 = vadd.f32 %v1967, %v2111
        %v2113 = vpop.f32.mrf.mxu0
        %2114 = vmatprep.mubr.bf16.mxu0 0
        %2115 = vmatmul.mubr.bf16.gmra.mxu0 %v1842
        %v2116 = vpop.f32.mrf.mxu0
        %v2117 = vadd.f32 %v1972, %v2116
        %v2118 = vpop.f32.mrf.mxu0
        %v2119 = vpop.f32.mrf.mxu0
        %v2120 = vadd.f32 %v1975, %v2119
        %v2121 = vpop.f32.mrf.mxu0
        %2122 = vmatprep.mubr.bf16.mxu0 0
        %2123 = vmatmul.mubr.bf16.gmra.mxu0 %v1843
        %v2124 = vpop.f32.mrf.mxu0
        %v2125 = vadd.f32 %v1980, %v2124
        %v2126 = vpop.f32.mrf.mxu0
        %v2127 = vpop.f32.mrf.mxu0
        %v2128 = vadd.f32 %v1983, %v2127
        %v2129 = vpop.f32.mrf.mxu0
        %2130 = vmatprep.mubr.bf16.mxu0 0
        %2131 = vmatmul.mubr.bf16.gmra.mxu0 %v1844
        %v2132 = vpop.f32.mrf.mxu0
        %v2133 = vadd.f32 %v1988, %v2132
        %v2134 = vpop.f32.mrf.mxu0
        %v2135 = vpop.f32.mrf.mxu0
        %v2136 = vadd.f32 %v1991, %v2135
        %v2137 = vpop.f32.mrf.mxu0
        %2138 = vmatprep.mubr.bf16.mxu0 0
        %2139 = vmatmul.mubr.bf16.gmra.mxu0 %v1845
        %v2140 = vpop.f32.mrf.mxu0
        %v2141 = vadd.f32 %v1996, %v2140
        %v2142 = vpop.f32.mrf.mxu0
        %v2143 = vpop.f32.mrf.mxu0
        %v2144 = vadd.f32 %v1999, %v2143
        %v2145 = vpop.f32.mrf.mxu0
        %2146 = vmatprep.mubr.bf16.mxu0 0
        %2147 = vmatmul.mubr.bf16.gmra.mxu0 %v1846
        %v2148 = vpop.f32.mrf.mxu0
        %v2149 = vadd.f32 %v2004, %v2148
        %v2150 = vpop.f32.mrf.mxu0
        %v2151 = vpop.f32.mrf.mxu0
        %v2152 = vadd.f32 %v2007, %v2151
        %v2153 = vpop.f32.mrf.mxu0
        %2154 = vmatprep.mubr.bf16.mxu0 0
        %2155 = vmatmul.mubr.bf16.gmra.mxu0 %v1847
        %v2156 = vpop.f32.mrf.mxu0
        %v2157 = vadd.f32 %v2012, %v2156
        %v2158 = vpop.f32.mrf.mxu0
        %v2159 = vpop.f32.mrf.mxu0
        %v2160 = vadd.f32 %v2015, %v2159
        %v2161 = vpop.f32.mrf.mxu0
        %2162 = vmatprep.mubr.bf16.mxu0 0
        %2163 = vmatmul.mubr.bf16.gmra.mxu0 %v1848
        %v2164 = vpop.f32.mrf.mxu0
        %v2165 = vadd.f32 %v2020, %v2164
        %v2166 = vpop.f32.mrf.mxu0
        %v2167 = vpop.f32.mrf.mxu0
        %v2168 = vadd.f32 %v2023, %v2167
        %v2169 = vpop.f32.mrf.mxu0
        %2170 = vdwg.mxu0
        %v2171 = vld [vmem:[%s9] sm:$0x1]
        %v2173 = vlaneseq
        %v2174 = vshrl.u32 %v2173, 7
        %v2175 = vsub.s32 0, %v2174
        %v2176 = vrot.slane %v2171, %v2175
        %v2178 = vadd.f32 %v2109, %v2176
        %v2179 = vadd.f32 %v2112, %v2176
        %v2180 = vadd.f32 %v2117, %v2176
        %v2181 = vadd.f32 %v2120, %v2176
        %v2182 = vadd.f32 %v2125, %v2176
        %v2183 = vadd.f32 %v2128, %v2176
        %v2184 = vadd.f32 %v2133, %v2176
        %v2185 = vadd.f32 %v2136, %v2176
        %v2186 = vadd.f32 %v2141, %v2176
        %v2187 = vadd.f32 %v2144, %v2176
        %v2188 = vadd.f32 %v2149, %v2176
        %v2189 = vadd.f32 %v2152, %v2176
        %v2190 = vadd.f32 %v2157, %v2176
        %v2191 = vadd.f32 %v2160, %v2176
        %v2192 = vadd.f32 %v2165, %v2176
        %v2193 = vadd.f32 %v2168, %v2176
        %v2194 = vmax.f32 %v2178, 0.0
        %v2195 = vmax.f32 %v2179, 0.0
        %v2196 = vmax.f32 %v2180, 0.0
        %v2197 = vmax.f32 %v2181, 0.0
        %v2198 = vmax.f32 %v2182, 0.0
        %v2199 = vmax.f32 %v2183, 0.0
        %v2200 = vmax.f32 %v2184, 0.0
        %v2201 = vmax.f32 %v2185, 0.0
        %v2202 = vmax.f32 %v2186, 0.0
        %v2203 = vmax.f32 %v2187, 0.0
        %v2204 = vmax.f32 %v2188, 0.0
        %v2205 = vmax.f32 %v2189, 0.0
        %v2206 = vmax.f32 %v2190, 0.0
        %v2207 = vmax.f32 %v2191, 0.0
        %v2208 = vmax.f32 %v2192, 0.0
        %v2209 = vmax.f32 %v2193, 0.0
        %2210 = vst [vmem:[%s464] sm:$0xff] %v2194
        %2211 = vst [vmem:[%s464 + $0x8] sm:$0xff] %v2195
        %2212 = vst [vmem:[%s464 + $0x10] sm:$0xff] %v2196
        %2213 = vst [vmem:[%s464 + $0x18] sm:$0xff] %v2197
        %2214 = vst [vmem:[%s464 + $0x20] sm:$0xff] %v2198
        %2215 = vst [vmem:[%s464 + $0x28] sm:$0xff] %v2199
        %2216 = vst [vmem:[%s464 + $0x30] sm:$0xff] %v2200
        %2217 = vst [vmem:[%s464 + $0x38] sm:$0xff] %v2201
        %2218 = vst [vmem:[%s464 + $0x40] sm:$0xff] %v2202
        %2219 = vst [vmem:[%s464 + $0x48] sm:$0xff] %v2203
        %2220 = vst [vmem:[%s464 + $0x50] sm:$0xff] %v2204
        %2221 = vst [vmem:[%s464 + $0x58] sm:$0xff] %v2205
        %2222 = vst [vmem:[%s464 + $0x60] sm:$0xff] %v2206
        %2223 = vst [vmem:[%s464 + $0x68] sm:$0xff] %v2207
        %2224 = vst [vmem:[%s464 + $0x70] sm:$0xff] %v2208
        %2225 = vst [vmem:[%s464 + $0x78] sm:$0xff] %v2209
        %s2226 = sand.u32 %s253, 1
        %s2227 = scalar_lea.sflag [#allocation4], %s2226
        %s2228 = sand.u32 %s253, 1
        %s2229 = smul.addr %s2228, 128
        %s2230 = scalar_lea.vmem [#allocation14], %s2229
        // Predicated region
        $region89: #{tpu_custom_call.1} parent=59 // pred_check
          %p2231 = pneg %p263
        $region90: #{tpu_custom_call.1} parent=59 // pred_check_branch
          %2233 = sbr.rel (%p2231) target = $region92
        $region91: #{tpu_custom_call.1} parent=59 // pred_region
          %s2234 = smul.u32 16, %s30
          %s2236 = ssub.s32 2048, 2048
          %2237 = vsyncadd %s2227, %s2236
          %s2238 = smul.addr %s2234, 128
          %s2239 = scalar_lea.hbm %s10, %s2238
          %s2240 = sshll.u32 %s2230, 4
          %s2241 = int_to_ptr.vmem [resolvable:$true] %s2240
          %2246 = dma.vmem_to_hbm [thread:$0]  %s2241, 2048, %s2239, %s2227, 128, 128, 8
        $region92: #{tpu_custom_call.1} parent=59 // pred_fallthru
          _
      $region60: #{tpu_custom_call.1} parent=5 // pred_fallthru
        _
      %p2247 = scmp.le.s32.totalorder 2, %s25
      // Predicated region
      $region93: #{tpu_custom_call.1} parent=5 // pred_check
        %p2248 = pneg %p2247
      $region94: #{tpu_custom_call.1} parent=5 // pred_check_branch
        %2250 = sbr.rel (%p2248) target = $region96
      $region95: #{tpu_custom_call.1} parent=5 // pred_region
        %s2251 = ssub.s32 %s25, 2
        // Predicated region
        $region97: #{tpu_custom_call.1} parent=95 // pred_check
          %p2252 = pneg %p269
        $region98: #{tpu_custom_call.1} parent=95 // pred_check_branch
          %2254 = sbr.rel (%p2252) target = $region100
        $region99: #{tpu_custom_call.1} parent=95 // pred_region
          %s2255 = sand.u32 %s254, 1
          %s2256 = scalar_lea.sflag [#allocation4], %s2255
          %s2257 = sand.u32 %s254, 1
          %s2258 = smul.addr %s2257, 128
          %s2259 = scalar_lea.vmem [#allocation14], %s2258
          %2260 = dma.done %s2256, 2048
        $region100: #{tpu_custom_call.1} parent=95 // pred_fallthru
          _
      $region96: #{tpu_custom_call.1} parent=5 // pred_fallthru
        _
    $region6: #{tpu_custom_call.1} parent=1 // loop_footer
      %s29 = sadd.s32 1, %s25
    $region7: #{tpu_custom_call.1} parent=1 // loop_footer_branch
      %24 = sbr.rel target = $region3
    $region8: #{tpu_custom_call.1} parent=1 // loop_exit
      _
    %2261 = vsyncpa [#allocation3], 1
    %s2262 = scalar_lea.sflag [#allocation3], 1
    %2263 = vsyncpa %s2262, 1
    %2264 = vsyncpa [#allocation6], 1
    %2265 = vsyncpa [#allocation9], 1
    %2266 = vsyncpa [#allocation12], 1
    %2267 = vsyncpa [#allocation4], 1
    %s2268 = scalar_lea.sflag [#allocation4], 1
    %2269 = vsyncpa %s2268, 1

</llo_original>
